<compile_context>
chip_gen: v7x
topology: tpu7x:2x2x1
jax: 0.10.0
libtpu: 0.0.40
codegen_flags: <defaults>
</compile_context>

<pallas_src>
import functools

import jax
import jax.numpy as jnp
from jax import lax
from jax.experimental import pallas as pl
from jax.experimental.pallas import tpu as pltpu


def ra_kernel(x_ref, y_ref, mask_ref, wc_ref, bc_ref, ws_ref, bs_ref, wf_ref,
              bf_ref, o_ref, *, W, HWp):
  """Fused RA forward for one image (grid iterates over the batch).

  x_ref  : (1, Cin, HWp)   encoder feature, HW on lanes, bf16
  y_ref  : (1, 1, HWp)     current prediction, lane-dense, f32
  mask_ref: (9, 1, HWp)    per-tap validity masks (kills conv boundary wrap), f32
  wc_ref : (Cout, Cin)     1x1 "convert" weight, bf16
  bc_ref : (Cout, 1)       convert bias, f32
  ws_ref : (3, Cout, 9*Cout) three 3x3 conv weights as (co, tap*ci) matrices, f32
  bs_ref : (3, Cout, 1)    their biases, f32
  wf_ref : (1, 9*Cout)     final 3x3 conv weight (1 output channel), f32
  bf_ref : (1, 1)          final bias, f32, in SMEM
  o_ref  : (1, 1, HWp)     output  y + convs(a * convert(x)), f32
  """
  # Static flat shifts of the 9 taps of a 3x3 conv (padding=1) in the
  # H*W-on-lanes layout; boundary wrap-around is zeroed by mask_ref.
  shifts = tuple(((kh - 1) * W + (kw - 1)) % HWp
                 for kh in range(3) for kw in range(3))

  # ---- 1x1 convert: one bf16 matmul, f32 accumulation.  (Cout, HWp)
  h = jnp.dot(wc_ref[...], x_ref[0],
              preferred_element_type=jnp.float32) + bc_ref[...]

  # ---- reverse-attention gate, lane-dense over H*W.
  y = y_ref[0]                                   # (1, HWp)
  cur = jax.nn.sigmoid(-y) * h                   # (Cout, HWp) f32

  def conv3x3(act, wmat, bias):
    # act: (Cout, HWp) f32.  Doubled copy -> each tap is ONE static lane slice
    # (no lane-axis concat of partial-lane slabs); taps stack along sublanes.
    act2 = jnp.concatenate([act, act], axis=1)   # (Cout, 2*HWp)
    taps = [act2[:, s:s + HWp] * mask_ref[t] for t, s in enumerate(shifts)]
    slab = jnp.concatenate(taps, axis=0)         # (9*Cout, HWp), sublane stack
    return jnp.dot(wmat, slab, preferred_element_type=jnp.float32) + bias

  # ---- three [3x3 conv + ReLU] layers, one fused matmul each.
  for layer in range(3):
    cur = jnp.maximum(conv3x3(cur, ws_ref[layer], bs_ref[layer]), 0.0)

  # ---- final 3x3 conv -> 1 channel, residual add, dense-lane store.
  res = conv3x3(cur, wf_ref[...], bf_ref[0, 0])  # (1, HWp)
  o_ref[0] = y + res


def ra_forward(x_nchw, y_nchw, params):
  """RA.forward.  Inputs/outputs are NCHW (PyTorch convention)."""
  N, Cin, H, W = x_nchw.shape
  Cout = params["wc"].shape[1]
  HW = H * W
  HWp = ((HW + 127) // 128) * 128               # lane-dense spatial axis
  pad = HWp - HW

  # Layout glue: channels on sublanes, flattened H*W on lanes.  x is DMA'd as
  # bf16 (halves the dominant HBM traffic); y stays f32 for the gate/residual.
  x = x_nchw.reshape(N, Cin, HW).astype(jnp.bfloat16)
  y = y_nchw.reshape(N, 1, HW).astype(jnp.float32)
  if pad:
    x = jnp.pad(x, ((0, 0), (0, 0), (0, pad)))
    y = jnp.pad(y, ((0, 0), (0, 0), (0, pad)))

  # Per-tap validity masks (also zero in the HW->HWp pad region).
  idx = jnp.arange(HWp)
  hh, ww = idx // W, idx % W
  valid = idx < HW
  mrows = []
  for kh in range(3):
    for kw in range(3):
      dh, dw = kh - 1, kw - 1
      mrows.append(valid & (hh + dh >= 0) & (hh + dh < H)
                   & (ww + dw >= 0) & (ww + dw < W))
  masks = jnp.stack(mrows).astype(jnp.float32).reshape(9, 1, HWp)

  # Weights packed so each conv is one (Cout, 9*Cout) x (9*Cout, HWp) matmul;
  # slab row order is tap*Cin + ci with tap = kh*3 + kw.
  wc = jnp.transpose(params["wc"]).astype(jnp.bfloat16)             # (Cout, Cin)
  bc = params["bc"].reshape(Cout, 1).astype(jnp.float32)
  ws = params["ws"].astype(jnp.float32).reshape(3, 9, Cout, Cout)   # (l, tap, ci, co)
  ws = jnp.transpose(ws, (0, 3, 1, 2)).reshape(3, Cout, 9 * Cout)   # (l, co, tap*ci)
  bs = jnp.transpose(params["bs"], (0, 2, 1)).astype(jnp.float32)   # (3, Cout, 1)
  wf = params["wf"].astype(jnp.float32).reshape(9, Cout, 1)
  wf = jnp.transpose(wf, (2, 0, 1)).reshape(1, 9 * Cout)            # (1, tap*ci)
  bf = params["bf"].astype(jnp.float32).reshape(1, 1)

  kernel = functools.partial(ra_kernel, W=W, HWp=HWp)

  def whole(shape):
    # Full-array block, constant index map: DMA'd once, stays VMEM-resident.
    return pl.BlockSpec(shape, lambda n, _r=len(shape): (0,) * _r)

  out = pl.pallas_call(
      kernel,
      out_shape=jax.ShapeDtypeStruct((N, 1, HWp), jnp.float32),
      grid=(N,),
      in_specs=[
          pl.BlockSpec((1, Cin, HWp), lambda n: (n, 0, 0)),          # x (bf16)
          pl.BlockSpec((1, 1, HWp), lambda n: (n, 0, 0)),            # y
          whole(masks.shape),
          whole(wc.shape), whole(bc.shape),
          whole(ws.shape), whole(bs.shape),
          whole(wf.shape),
          pl.BlockSpec(memory_space=pltpu.MemorySpace.SMEM),         # bf scalar
      ],
      out_specs=pl.BlockSpec((1, 1, HWp), lambda n: (n, 0, 0)),
      compiler_params=pltpu.CompilerParams(
          dimension_semantics=("parallel",),    # batch across v7x TensorCores
          vmem_limit_bytes=32 * 1024 * 1024),
  )(x, y, masks, wc, bc, ws, bs, wf, bf)

  return out[:, 0, :HW].reshape(N, 1, H, W)     # back to NCHW: (N, 1, H, W)


def ra_reference(x_nchw, y_nchw, params):
  """Pure-JAX f32 reference (mirrors the PyTorch module) for a sanity check."""
  x = jnp.transpose(x_nchw, (0, 2, 3, 1)).astype(jnp.float32)
  y = jnp.transpose(y_nchw, (0, 2, 3, 1)).astype(jnp.float32)
  prec = jax.lax.Precision.HIGHEST
  dn = ("NHWC", "HWIO", "NHWC")

  a = jax.nn.sigmoid(-y)
  h = jnp.einsum("nhwc,co->nhwo", x, params["wc"], precision=prec) + params["bc"][0]
  h = a * h
  for l in range(3):
    h = lax.conv_general_dilated(h, params["ws"][l], (1, 1), "SAME",
                                 dimension_numbers=dn, precision=prec)
    h = jnp.maximum(h + params["bs"][l][0], 0.0)
  out = lax.conv_general_dilated(h, params["wf"], (1, 1), "SAME",
                                 dimension_numbers=dn, precision=prec)
  out = out + params["bf"][0]
  return jnp.transpose(y + out, (0, 3, 1, 2))


def init_params(key, in_channel, out_channel):
  ks = jax.random.split(key, 6)
  return {
      "wc": 0.5 * jax.random.normal(ks[0], (in_channel, out_channel), jnp.float32),
      "bc": 0.1 * jax.random.normal(ks[1], (1, out_channel), jnp.float32),
      "ws": 0.2 * jax.random.normal(ks[2], (3, 3, 3, out_channel, out_channel), jnp.float32),
      "bs": 0.1 * jax.random.normal(ks[3], (3, 1, out_channel), jnp.float32),
      "wf": 0.2 * jax.random.normal(ks[4], (3, 3, out_channel, 1), jnp.float32),
      "bf": 0.1 * jax.random.normal(ks[5], (1, 1), jnp.float32),
  }


if __name__ == "__main__":
  N, Cin, Cout, H, W = 2, 4, 8, 16, 16
  key = jax.random.PRNGKey(0)
  kx, ky, kp = jax.random.split(key, 3)

  x = jax.random.normal(kx, (N, Cin, H, W), jnp.float32)   # encoder feature (NCHW)
  y = jax.random.normal(ky, (N, 1, H, W), jnp.float32)     # current prediction (NCHW)
  params = init_params(kp, Cin, Cout)

  out = jax.block_until_ready(jax.jit(ra_forward)(x, y, params))
  ref = jax.block_until_ready(ra_reference(x, y, params))

  assert out.shape == (N, 1, H, W)
  max_err = float(jnp.max(jnp.abs(out - ref)))
  # Only x (and the 1x1 weight) are bf16; intermediate activations and the 3x3
  # convs run in f32, so the error is just input quantization (typically ~1e-2).
  assert jnp.allclose(out, ref, atol=1e-1, rtol=1e-1), f"max abs err {max_err}"

  print("KERNEL_OK")
</pallas_src>

<mosaic_0001>
module attributes {stable_mosaic.version = 11 : i64} {
  func.func @ra_kernel(%arg0: i32, %arg1: memref<1x4x256xbf16, #tpu.memory_space<vmem>>, %arg2: memref<1x1x256xf32, #tpu.memory_space<vmem>>, %arg3: memref<9x1x256xf32, #tpu.memory_space<vmem>>, %arg4: memref<8x4xbf16, #tpu.memory_space<vmem>>, %arg5: memref<8x1xf32, #tpu.memory_space<vmem>>, %arg6: memref<3x8x72xf32, #tpu.memory_space<vmem>>, %arg7: memref<3x8x1xf32, #tpu.memory_space<vmem>>, %arg8: memref<1x72xf32, #tpu.memory_space<vmem>>, %arg9: memref<1x1xf32, #tpu.memory_space<smem>>, %arg10: memref<1x1x256xf32, #tpu.memory_space<vmem>>) attributes {dimension_semantics = [#tpu.dimension_semantics<parallel>], iteration_bounds = array<i64: 2>, scalar_prefetch = 0 : i64, scratch_operands = 0 : i64, tpu.core_type = #tpu.core_type<tc>, window_params = [{transform_indices = @transform_0, window_bounds = array<i64: 1, 4, 256>}, {transform_indices = @transform_1, window_bounds = array<i64: 1, 1, 256>}, {pipeline_mode = #tpu.pipeline_mode<synchronous>, transform_indices = @transform_2, window_bounds = array<i64: 9, 1, 256>}, {pipeline_mode = #tpu.pipeline_mode<synchronous>, transform_indices = @transform_3, window_bounds = array<i64: 8, 4>}, {pipeline_mode = #tpu.pipeline_mode<synchronous>, transform_indices = @transform_4, window_bounds = array<i64: 8, 1>}, {pipeline_mode = #tpu.pipeline_mode<synchronous>, transform_indices = @transform_5, window_bounds = array<i64: 3, 8, 72>}, {pipeline_mode = #tpu.pipeline_mode<synchronous>, transform_indices = @transform_6, window_bounds = array<i64: 3, 8, 1>}, {pipeline_mode = #tpu.pipeline_mode<synchronous>, transform_indices = @transform_7, window_bounds = array<i64: 1, 72>}, {transform_indices = @transform_8, window_bounds = array<i64: 1, 1>}, {transform_indices = @transform_9, window_bounds = array<i64: 1, 1, 256>}]} {
    %c0 = arith.constant 0 : index
    %c0_0 = arith.constant 0 : index
    %0 = vector.load %arg4[%c0, %c0_0] : memref<8x4xbf16, #tpu.memory_space<vmem>>, vector<8x4xbf16>
    %c0_1 = arith.constant 0 : index
    %c0_2 = arith.constant 0 : index
    %c0_3 = arith.constant 0 : index
    %1 = vector.load %arg1[%c0_1, %c0_2, %c0_3] : memref<1x4x256xbf16, #tpu.memory_space<vmem>>, vector<1x4x256xbf16>
    %2 = vector.shape_cast %1 : vector<1x4x256xbf16> to vector<4x256xbf16>
    %cst = arith.constant dense<0.000000e+00> : vector<8x256xf32>
    %3 = tpu.matmul %0, %2, %cst {dimension_numbers = #tpu.dot_dimension_numbers<[1], [0], [0], [1], [0, 0, 1, 1], [], []>} : vector<8x4xbf16>, vector<4x256xbf16>, vector<8x256xf32> -> vector<8x256xf32>
    %c0_4 = arith.constant 0 : index
    %c0_5 = arith.constant 0 : index
    %4 = vector.load %arg5[%c0_4, %c0_5] : memref<8x1xf32, #tpu.memory_space<vmem>>, vector<8x1xf32>
    %5 = vector.broadcast %4 : vector<8x1xf32> to vector<8x256xf32>
    %6 = arith.addf %3, %5 : vector<8x256xf32>
    %c0_6 = arith.constant 0 : index
    %c0_7 = arith.constant 0 : index
    %c0_8 = arith.constant 0 : index
    %7 = vector.load %arg2[%c0_6, %c0_7, %c0_8] : memref<1x1x256xf32, #tpu.memory_space<vmem>>, vector<1x1x256xf32>
    %8 = vector.shape_cast %7 : vector<1x1x256xf32> to vector<1x256xf32>
    %cst_9 = arith.constant 0.000000e+00 : f32
    %9 = vector.broadcast %cst_9 : f32 to vector<1x256xf32>
    %10 = arith.subf %9, %8 : vector<1x256xf32>
    %11 = arith.negf %10 : vector<1x256xf32>
    %12 = math.exp %11 : vector<1x256xf32>
    %cst_10 = arith.constant 1.000000e+00 : f32
    %13 = vector.broadcast %cst_10 : f32 to vector<1x256xf32>
    %14 = arith.addf %13, %12 : vector<1x256xf32>
    %15 = arith.divf %13, %14 : vector<1x256xf32>
    %16 = vector.broadcast %15 : vector<1x256xf32> to vector<8x256xf32>
    %17 = arith.mulf %16, %6 : vector<8x256xf32>
    %c0_11 = arith.constant 0 : index
    %c0_12 = arith.constant 0 : index
    %c0_13 = arith.constant 0 : index
    %18 = vector.load %arg6[%c0_11, %c0_12, %c0_13] : memref<3x8x72xf32, #tpu.memory_space<vmem>>, vector<1x8x72xf32>
    %19 = vector.shape_cast %18 : vector<1x8x72xf32> to vector<8x72xf32>
    %c0_14 = arith.constant 0 : index
    %c0_15 = arith.constant 0 : index
    %c0_16 = arith.constant 0 : index
    %20 = vector.load %arg7[%c0_14, %c0_15, %c0_16] : memref<3x8x1xf32, #tpu.memory_space<vmem>>, vector<1x8x1xf32>
    %21 = vector.shape_cast %20 : vector<1x8x1xf32> to vector<8x1xf32>
    %22 = tpu.concatenate %17, %17 in 1 : vector<8x256xf32>, vector<8x256xf32> -> vector<8x512xf32>
    %23 = vector.extract_strided_slice %22 {offsets = [0, 239], sizes = [8, 256], strides = [1, 1]} : vector<8x512xf32> to vector<8x256xf32>
    %c0_17 = arith.constant 0 : index
    %c0_18 = arith.constant 0 : index
    %c0_19 = arith.constant 0 : index
    %24 = vector.load %arg3[%c0_17, %c0_18, %c0_19] : memref<9x1x256xf32, #tpu.memory_space<vmem>>, vector<1x1x256xf32>
    %25 = vector.shape_cast %24 : vector<1x1x256xf32> to vector<1x256xf32>
    %26 = vector.broadcast %25 : vector<1x256xf32> to vector<8x256xf32>
    %27 = arith.mulf %23, %26 : vector<8x256xf32>
    %28 = vector.extract_strided_slice %22 {offsets = [0, 240], sizes = [8, 256], strides = [1, 1]} : vector<8x512xf32> to vector<8x256xf32>
    %c1 = arith.constant 1 : index
    %c0_20 = arith.constant 0 : index
    %c0_21 = arith.constant 0 : index
    %29 = vector.load %arg3[%c1, %c0_20, %c0_21] : memref<9x1x256xf32, #tpu.memory_space<vmem>>, vector<1x1x256xf32>
    %30 = vector.shape_cast %29 : vector<1x1x256xf32> to vector<1x256xf32>
    %31 = vector.broadcast %30 : vector<1x256xf32> to vector<8x256xf32>
    %32 = arith.mulf %28, %31 : vector<8x256xf32>
    %33 = vector.extract_strided_slice %22 {offsets = [0, 241], sizes = [8, 256], strides = [1, 1]} : vector<8x512xf32> to vector<8x256xf32>
    %c2 = arith.constant 2 : index
    %c0_22 = arith.constant 0 : index
    %c0_23 = arith.constant 0 : index
    %34 = vector.load %arg3[%c2, %c0_22, %c0_23] : memref<9x1x256xf32, #tpu.memory_space<vmem>>, vector<1x1x256xf32>
    %35 = vector.shape_cast %34 : vector<1x1x256xf32> to vector<1x256xf32>
    %36 = vector.broadcast %35 : vector<1x256xf32> to vector<8x256xf32>
    %37 = arith.mulf %33, %36 : vector<8x256xf32>
    %38 = vector.extract_strided_slice %22 {offsets = [0, 255], sizes = [8, 256], strides = [1, 1]} : vector<8x512xf32> to vector<8x256xf32>
    %c3 = arith.constant 3 : index
    %c0_24 = arith.constant 0 : index
    %c0_25 = arith.constant 0 : index
    %39 = vector.load %arg3[%c3, %c0_24, %c0_25] : memref<9x1x256xf32, #tpu.memory_space<vmem>>, vector<1x1x256xf32>
    %40 = vector.shape_cast %39 : vector<1x1x256xf32> to vector<1x256xf32>
    %41 = vector.broadcast %40 : vector<1x256xf32> to vector<8x256xf32>
    %42 = arith.mulf %38, %41 : vector<8x256xf32>
    %43 = vector.extract_strided_slice %22 {offsets = [0, 0], sizes = [8, 256], strides = [1, 1]} : vector<8x512xf32> to vector<8x256xf32>
    %c4 = arith.constant 4 : index
    %c0_26 = arith.constant 0 : index
    %c0_27 = arith.constant 0 : index
    %44 = vector.load %arg3[%c4, %c0_26, %c0_27] : memref<9x1x256xf32, #tpu.memory_space<vmem>>, vector<1x1x256xf32>
    %45 = vector.shape_cast %44 : vector<1x1x256xf32> to vector<1x256xf32>
    %46 = vector.broadcast %45 : vector<1x256xf32> to vector<8x256xf32>
    %47 = arith.mulf %43, %46 : vector<8x256xf32>
    %48 = vector.extract_strided_slice %22 {offsets = [0, 1], sizes = [8, 256], strides = [1, 1]} : vector<8x512xf32> to vector<8x256xf32>
    %c5 = arith.constant 5 : index
    %c0_28 = arith.constant 0 : index
    %c0_29 = arith.constant 0 : index
    %49 = vector.load %arg3[%c5, %c0_28, %c0_29] : memref<9x1x256xf32, #tpu.memory_space<vmem>>, vector<1x1x256xf32>
    %50 = vector.shape_cast %49 : vector<1x1x256xf32> to vector<1x256xf32>
    %51 = vector.broadcast %50 : vector<1x256xf32> to vector<8x256xf32>
    %52 = arith.mulf %48, %51 : vector<8x256xf32>
    %53 = vector.extract_strided_slice %22 {offsets = [0, 15], sizes = [8, 256], strides = [1, 1]} : vector<8x512xf32> to vector<8x256xf32>
    %c6 = arith.constant 6 : index
    %c0_30 = arith.constant 0 : index
    %c0_31 = arith.constant 0 : index
    %54 = vector.load %arg3[%c6, %c0_30, %c0_31] : memref<9x1x256xf32, #tpu.memory_space<vmem>>, vector<1x1x256xf32>
    %55 = vector.shape_cast %54 : vector<1x1x256xf32> to vector<1x256xf32>
    %56 = vector.broadcast %55 : vector<1x256xf32> to vector<8x256xf32>
    %57 = arith.mulf %53, %56 : vector<8x256xf32>
    %58 = vector.extract_strided_slice %22 {offsets = [0, 16], sizes = [8, 256], strides = [1, 1]} : vector<8x512xf32> to vector<8x256xf32>
    %c7 = arith.constant 7 : index
    %c0_32 = arith.constant 0 : index
    %c0_33 = arith.constant 0 : index
    %59 = vector.load %arg3[%c7, %c0_32, %c0_33] : memref<9x1x256xf32, #tpu.memory_space<vmem>>, vector<1x1x256xf32>
    %60 = vector.shape_cast %59 : vector<1x1x256xf32> to vector<1x256xf32>
    %61 = vector.broadcast %60 : vector<1x256xf32> to vector<8x256xf32>
    %62 = arith.mulf %58, %61 : vector<8x256xf32>
    %63 = vector.extract_strided_slice %22 {offsets = [0, 17], sizes = [8, 256], strides = [1, 1]} : vector<8x512xf32> to vector<8x256xf32>
    %c8 = arith.constant 8 : index
    %c0_34 = arith.constant 0 : index
    %c0_35 = arith.constant 0 : index
    %64 = vector.load %arg3[%c8, %c0_34, %c0_35] : memref<9x1x256xf32, #tpu.memory_space<vmem>>, vector<1x1x256xf32>
    %65 = vector.shape_cast %64 : vector<1x1x256xf32> to vector<1x256xf32>
    %66 = vector.broadcast %65 : vector<1x256xf32> to vector<8x256xf32>
    %67 = arith.mulf %63, %66 : vector<8x256xf32>
    %68 = tpu.concatenate %27, %32, %37, %42, %47, %52, %57, %62, %67 in 0 : vector<8x256xf32>, vector<8x256xf32>, vector<8x256xf32>, vector<8x256xf32>, vector<8x256xf32>, vector<8x256xf32>, vector<8x256xf32>, vector<8x256xf32>, vector<8x256xf32> -> vector<72x256xf32>
    %cst_36 = arith.constant dense<0.000000e+00> : vector<8x256xf32>
    %69 = tpu.matmul %19, %68, %cst_36 {dimension_numbers = #tpu.dot_dimension_numbers<[1], [0], [0], [1], [0, 0, 1, 1], [], []>} : vector<8x72xf32>, vector<72x256xf32>, vector<8x256xf32> -> vector<8x256xf32>
    %70 = vector.broadcast %21 : vector<8x1xf32> to vector<8x256xf32>
    %71 = arith.addf %69, %70 : vector<8x256xf32>
    %cst_37 = arith.constant 0.000000e+00 : f32
    %72 = vector.broadcast %cst_37 : f32 to vector<8x256xf32>
    %73 = arith.maximumf %71, %72 : vector<8x256xf32>
    %c1_38 = arith.constant 1 : index
    %c0_39 = arith.constant 0 : index
    %c0_40 = arith.constant 0 : index
    %74 = vector.load %arg6[%c1_38, %c0_39, %c0_40] : memref<3x8x72xf32, #tpu.memory_space<vmem>>, vector<1x8x72xf32>
    %75 = vector.shape_cast %74 : vector<1x8x72xf32> to vector<8x72xf32>
    %c1_41 = arith.constant 1 : index
    %c0_42 = arith.constant 0 : index
    %c0_43 = arith.constant 0 : index
    %76 = vector.load %arg7[%c1_41, %c0_42, %c0_43] : memref<3x8x1xf32, #tpu.memory_space<vmem>>, vector<1x8x1xf32>
    %77 = vector.shape_cast %76 : vector<1x8x1xf32> to vector<8x1xf32>
    %78 = tpu.concatenate %73, %73 in 1 : vector<8x256xf32>, vector<8x256xf32> -> vector<8x512xf32>
    %79 = vector.extract_strided_slice %78 {offsets = [0, 239], sizes = [8, 256], strides = [1, 1]} : vector<8x512xf32> to vector<8x256xf32>
    %c0_44 = arith.constant 0 : index
    %c0_45 = arith.constant 0 : index
    %c0_46 = arith.constant 0 : index
    %80 = vector.load %arg3[%c0_44, %c0_45, %c0_46] : memref<9x1x256xf32, #tpu.memory_space<vmem>>, vector<1x1x256xf32>
    %81 = vector.shape_cast %80 : vector<1x1x256xf32> to vector<1x256xf32>
    %82 = vector.broadcast %81 : vector<1x256xf32> to vector<8x256xf32>
    %83 = arith.mulf %79, %82 : vector<8x256xf32>
    %84 = vector.extract_strided_slice %78 {offsets = [0, 240], sizes = [8, 256], strides = [1, 1]} : vector<8x512xf32> to vector<8x256xf32>
    %c1_47 = arith.constant 1 : index
    %c0_48 = arith.constant 0 : index
    %c0_49 = arith.constant 0 : index
    %85 = vector.load %arg3[%c1_47, %c0_48, %c0_49] : memref<9x1x256xf32, #tpu.memory_space<vmem>>, vector<1x1x256xf32>
    %86 = vector.shape_cast %85 : vector<1x1x256xf32> to vector<1x256xf32>
    %87 = vector.broadcast %86 : vector<1x256xf32> to vector<8x256xf32>
    %88 = arith.mulf %84, %87 : vector<8x256xf32>
    %89 = vector.extract_strided_slice %78 {offsets = [0, 241], sizes = [8, 256], strides = [1, 1]} : vector<8x512xf32> to vector<8x256xf32>
    %c2_50 = arith.constant 2 : index
    %c0_51 = arith.constant 0 : index
    %c0_52 = arith.constant 0 : index
    %90 = vector.load %arg3[%c2_50, %c0_51, %c0_52] : memref<9x1x256xf32, #tpu.memory_space<vmem>>, vector<1x1x256xf32>
    %91 = vector.shape_cast %90 : vector<1x1x256xf32> to vector<1x256xf32>
    %92 = vector.broadcast %91 : vector<1x256xf32> to vector<8x256xf32>
    %93 = arith.mulf %89, %92 : vector<8x256xf32>
    %94 = vector.extract_strided_slice %78 {offsets = [0, 255], sizes = [8, 256], strides = [1, 1]} : vector<8x512xf32> to vector<8x256xf32>
    %c3_53 = arith.constant 3 : index
    %c0_54 = arith.constant 0 : index
    %c0_55 = arith.constant 0 : index
    %95 = vector.load %arg3[%c3_53, %c0_54, %c0_55] : memref<9x1x256xf32, #tpu.memory_space<vmem>>, vector<1x1x256xf32>
    %96 = vector.shape_cast %95 : vector<1x1x256xf32> to vector<1x256xf32>
    %97 = vector.broadcast %96 : vector<1x256xf32> to vector<8x256xf32>
    %98 = arith.mulf %94, %97 : vector<8x256xf32>
    %99 = vector.extract_strided_slice %78 {offsets = [0, 0], sizes = [8, 256], strides = [1, 1]} : vector<8x512xf32> to vector<8x256xf32>
    %c4_56 = arith.constant 4 : index
    %c0_57 = arith.constant 0 : index
    %c0_58 = arith.constant 0 : index
    %100 = vector.load %arg3[%c4_56, %c0_57, %c0_58] : memref<9x1x256xf32, #tpu.memory_space<vmem>>, vector<1x1x256xf32>
    %101 = vector.shape_cast %100 : vector<1x1x256xf32> to vector<1x256xf32>
    %102 = vector.broadcast %101 : vector<1x256xf32> to vector<8x256xf32>
    %103 = arith.mulf %99, %102 : vector<8x256xf32>
    %104 = vector.extract_strided_slice %78 {offsets = [0, 1], sizes = [8, 256], strides = [1, 1]} : vector<8x512xf32> to vector<8x256xf32>
    %c5_59 = arith.constant 5 : index
    %c0_60 = arith.constant 0 : index
    %c0_61 = arith.constant 0 : index
    %105 = vector.load %arg3[%c5_59, %c0_60, %c0_61] : memref<9x1x256xf32, #tpu.memory_space<vmem>>, vector<1x1x256xf32>
    %106 = vector.shape_cast %105 : vector<1x1x256xf32> to vector<1x256xf32>
    %107 = vector.broadcast %106 : vector<1x256xf32> to vector<8x256xf32>
    %108 = arith.mulf %104, %107 : vector<8x256xf32>
    %109 = vector.extract_strided_slice %78 {offsets = [0, 15], sizes = [8, 256], strides = [1, 1]} : vector<8x512xf32> to vector<8x256xf32>
    %c6_62 = arith.constant 6 : index
    %c0_63 = arith.constant 0 : index
    %c0_64 = arith.constant 0 : index
    %110 = vector.load %arg3[%c6_62, %c0_63, %c0_64] : memref<9x1x256xf32, #tpu.memory_space<vmem>>, vector<1x1x256xf32>
    %111 = vector.shape_cast %110 : vector<1x1x256xf32> to vector<1x256xf32>
    %112 = vector.broadcast %111 : vector<1x256xf32> to vector<8x256xf32>
    %113 = arith.mulf %109, %112 : vector<8x256xf32>
    %114 = vector.extract_strided_slice %78 {offsets = [0, 16], sizes = [8, 256], strides = [1, 1]} : vector<8x512xf32> to vector<8x256xf32>
    %c7_65 = arith.constant 7 : index
    %c0_66 = arith.constant 0 : index
    %c0_67 = arith.constant 0 : index
    %115 = vector.load %arg3[%c7_65, %c0_66, %c0_67] : memref<9x1x256xf32, #tpu.memory_space<vmem>>, vector<1x1x256xf32>
    %116 = vector.shape_cast %115 : vector<1x1x256xf32> to vector<1x256xf32>
    %117 = vector.broadcast %116 : vector<1x256xf32> to vector<8x256xf32>
    %118 = arith.mulf %114, %117 : vector<8x256xf32>
    %119 = vector.extract_strided_slice %78 {offsets = [0, 17], sizes = [8, 256], strides = [1, 1]} : vector<8x512xf32> to vector<8x256xf32>
    %c8_68 = arith.constant 8 : index
    %c0_69 = arith.constant 0 : index
    %c0_70 = arith.constant 0 : index
    %120 = vector.load %arg3[%c8_68, %c0_69, %c0_70] : memref<9x1x256xf32, #tpu.memory_space<vmem>>, vector<1x1x256xf32>
    %121 = vector.shape_cast %120 : vector<1x1x256xf32> to vector<1x256xf32>
    %122 = vector.broadcast %121 : vector<1x256xf32> to vector<8x256xf32>
    %123 = arith.mulf %119, %122 : vector<8x256xf32>
    %124 = tpu.concatenate %83, %88, %93, %98, %103, %108, %113, %118, %123 in 0 : vector<8x256xf32>, vector<8x256xf32>, vector<8x256xf32>, vector<8x256xf32>, vector<8x256xf32>, vector<8x256xf32>, vector<8x256xf32>, vector<8x256xf32>, vector<8x256xf32> -> vector<72x256xf32>
    %cst_71 = arith.constant dense<0.000000e+00> : vector<8x256xf32>
    %125 = tpu.matmul %75, %124, %cst_71 {dimension_numbers = #tpu.dot_dimension_numbers<[1], [0], [0], [1], [0, 0, 1, 1], [], []>} : vector<8x72xf32>, vector<72x256xf32>, vector<8x256xf32> -> vector<8x256xf32>
    %126 = vector.broadcast %77 : vector<8x1xf32> to vector<8x256xf32>
    %127 = arith.addf %125, %126 : vector<8x256xf32>
    %cst_72 = arith.constant 0.000000e+00 : f32
    %128 = vector.broadcast %cst_72 : f32 to vector<8x256xf32>
    %129 = arith.maximumf %127, %128 : vector<8x256xf32>
    %c2_73 = arith.constant 2 : index
    %c0_74 = arith.constant 0 : index
    %c0_75 = arith.constant 0 : index
    %130 = vector.load %arg6[%c2_73, %c0_74, %c0_75] : memref<3x8x72xf32, #tpu.memory_space<vmem>>, vector<1x8x72xf32>
    %131 = vector.shape_cast %130 : vector<1x8x72xf32> to vector<8x72xf32>
    %c2_76 = arith.constant 2 : index
    %c0_77 = arith.constant 0 : index
    %c0_78 = arith.constant 0 : index
    %132 = vector.load %arg7[%c2_76, %c0_77, %c0_78] : memref<3x8x1xf32, #tpu.memory_space<vmem>>, vector<1x8x1xf32>
    %133 = vector.shape_cast %132 : vector<1x8x1xf32> to vector<8x1xf32>
    %134 = tpu.concatenate %129, %129 in 1 : vector<8x256xf32>, vector<8x256xf32> -> vector<8x512xf32>
    %135 = vector.extract_strided_slice %134 {offsets = [0, 239], sizes = [8, 256], strides = [1, 1]} : vector<8x512xf32> to vector<8x256xf32>
    %c0_79 = arith.constant 0 : index
    %c0_80 = arith.constant 0 : index
    %c0_81 = arith.constant 0 : index
    %136 = vector.load %arg3[%c0_79, %c0_80, %c0_81] : memref<9x1x256xf32, #tpu.memory_space<vmem>>, vector<1x1x256xf32>
    %137 = vector.shape_cast %136 : vector<1x1x256xf32> to vector<1x256xf32>
    %138 = vector.broadcast %137 : vector<1x256xf32> to vector<8x256xf32>
    %139 = arith.mulf %135, %138 : vector<8x256xf32>
    %140 = vector.extract_strided_slice %134 {offsets = [0, 240], sizes = [8, 256], strides = [1, 1]} : vector<8x512xf32> to vector<8x256xf32>
    %c1_82 = arith.constant 1 : index
    %c0_83 = arith.constant 0 : index
    %c0_84 = arith.constant 0 : index
    %141 = vector.load %arg3[%c1_82, %c0_83, %c0_84] : memref<9x1x256xf32, #tpu.memory_space<vmem>>, vector<1x1x256xf32>
    %142 = vector.shape_cast %141 : vector<1x1x256xf32> to vector<1x256xf32>
    %143 = vector.broadcast %142 : vector<1x256xf32> to vector<8x256xf32>
    %144 = arith.mulf %140, %143 : vector<8x256xf32>
    %145 = vector.extract_strided_slice %134 {offsets = [0, 241], sizes = [8, 256], strides = [1, 1]} : vector<8x512xf32> to vector<8x256xf32>
    %c2_85 = arith.constant 2 : index
    %c0_86 = arith.constant 0 : index
    %c0_87 = arith.constant 0 : index
    %146 = vector.load %arg3[%c2_85, %c0_86, %c0_87] : memref<9x1x256xf32, #tpu.memory_space<vmem>>, vector<1x1x256xf32>
    %147 = vector.shape_cast %146 : vector<1x1x256xf32> to vector<1x256xf32>
    %148 = vector.broadcast %147 : vector<1x256xf32> to vector<8x256xf32>
    %149 = arith.mulf %145, %148 : vector<8x256xf32>
    %150 = vector.extract_strided_slice %134 {offsets = [0, 255], sizes = [8, 256], strides = [1, 1]} : vector<8x512xf32> to vector<8x256xf32>
    %c3_88 = arith.constant 3 : index
    %c0_89 = arith.constant 0 : index
    %c0_90 = arith.constant 0 : index
    %151 = vector.load %arg3[%c3_88, %c0_89, %c0_90] : memref<9x1x256xf32, #tpu.memory_space<vmem>>, vector<1x1x256xf32>
    %152 = vector.shape_cast %151 : vector<1x1x256xf32> to vector<1x256xf32>
    %153 = vector.broadcast %152 : vector<1x256xf32> to vector<8x256xf32>
    %154 = arith.mulf %150, %153 : vector<8x256xf32>
    %155 = vector.extract_strided_slice %134 {offsets = [0, 0], sizes = [8, 256], strides = [1, 1]} : vector<8x512xf32> to vector<8x256xf32>
    %c4_91 = arith.constant 4 : index
    %c0_92 = arith.constant 0 : index
    %c0_93 = arith.constant 0 : index
    %156 = vector.load %arg3[%c4_91, %c0_92, %c0_93] : memref<9x1x256xf32, #tpu.memory_space<vmem>>, vector<1x1x256xf32>
    %157 = vector.shape_cast %156 : vector<1x1x256xf32> to vector<1x256xf32>
    %158 = vector.broadcast %157 : vector<1x256xf32> to vector<8x256xf32>
    %159 = arith.mulf %155, %158 : vector<8x256xf32>
    %160 = vector.extract_strided_slice %134 {offsets = [0, 1], sizes = [8, 256], strides = [1, 1]} : vector<8x512xf32> to vector<8x256xf32>
    %c5_94 = arith.constant 5 : index
    %c0_95 = arith.constant 0 : index
    %c0_96 = arith.constant 0 : index
    %161 = vector.load %arg3[%c5_94, %c0_95, %c0_96] : memref<9x1x256xf32, #tpu.memory_space<vmem>>, vector<1x1x256xf32>
    %162 = vector.shape_cast %161 : vector<1x1x256xf32> to vector<1x256xf32>
    %163 = vector.broadcast %162 : vector<1x256xf32> to vector<8x256xf32>
    %164 = arith.mulf %160, %163 : vector<8x256xf32>
    %165 = vector.extract_strided_slice %134 {offsets = [0, 15], sizes = [8, 256], strides = [1, 1]} : vector<8x512xf32> to vector<8x256xf32>
    %c6_97 = arith.constant 6 : index
    %c0_98 = arith.constant 0 : index
    %c0_99 = arith.constant 0 : index
    %166 = vector.load %arg3[%c6_97, %c0_98, %c0_99] : memref<9x1x256xf32, #tpu.memory_space<vmem>>, vector<1x1x256xf32>
    %167 = vector.shape_cast %166 : vector<1x1x256xf32> to vector<1x256xf32>
    %168 = vector.broadcast %167 : vector<1x256xf32> to vector<8x256xf32>
    %169 = arith.mulf %165, %168 : vector<8x256xf32>
    %170 = vector.extract_strided_slice %134 {offsets = [0, 16], sizes = [8, 256], strides = [1, 1]} : vector<8x512xf32> to vector<8x256xf32>
    %c7_100 = arith.constant 7 : index
    %c0_101 = arith.constant 0 : index
    %c0_102 = arith.constant 0 : index
    %171 = vector.load %arg3[%c7_100, %c0_101, %c0_102] : memref<9x1x256xf32, #tpu.memory_space<vmem>>, vector<1x1x256xf32>
    %172 = vector.shape_cast %171 : vector<1x1x256xf32> to vector<1x256xf32>
    %173 = vector.broadcast %172 : vector<1x256xf32> to vector<8x256xf32>
    %174 = arith.mulf %170, %173 : vector<8x256xf32>
    %175 = vector.extract_strided_slice %134 {offsets = [0, 17], sizes = [8, 256], strides = [1, 1]} : vector<8x512xf32> to vector<8x256xf32>
    %c8_103 = arith.constant 8 : index
    %c0_104 = arith.constant 0 : index
    %c0_105 = arith.constant 0 : index
    %176 = vector.load %arg3[%c8_103, %c0_104, %c0_105] : memref<9x1x256xf32, #tpu.memory_space<vmem>>, vector<1x1x256xf32>
    %177 = vector.shape_cast %176 : vector<1x1x256xf32> to vector<1x256xf32>
    %178 = vector.broadcast %177 : vector<1x256xf32> to vector<8x256xf32>
    %179 = arith.mulf %175, %178 : vector<8x256xf32>
    %180 = tpu.concatenate %139, %144, %149, %154, %159, %164, %169, %174, %179 in 0 : vector<8x256xf32>, vector<8x256xf32>, vector<8x256xf32>, vector<8x256xf32>, vector<8x256xf32>, vector<8x256xf32>, vector<8x256xf32>, vector<8x256xf32>, vector<8x256xf32> -> vector<72x256xf32>
    %cst_106 = arith.constant dense<0.000000e+00> : vector<8x256xf32>
    %181 = tpu.matmul %131, %180, %cst_106 {dimension_numbers = #tpu.dot_dimension_numbers<[1], [0], [0], [1], [0, 0, 1, 1], [], []>} : vector<8x72xf32>, vector<72x256xf32>, vector<8x256xf32> -> vector<8x256xf32>
    %182 = vector.broadcast %133 : vector<8x1xf32> to vector<8x256xf32>
    %183 = arith.addf %181, %182 : vector<8x256xf32>
    %cst_107 = arith.constant 0.000000e+00 : f32
    %184 = vector.broadcast %cst_107 : f32 to vector<8x256xf32>
    %185 = arith.maximumf %183, %184 : vector<8x256xf32>
    %c0_108 = arith.constant 0 : index
    %c0_109 = arith.constant 0 : index
    %186 = vector.load %arg8[%c0_108, %c0_109] : memref<1x72xf32, #tpu.memory_space<vmem>>, vector<1x72xf32>
    %c0_110 = arith.constant 0 : index
    %c0_111 = arith.constant 0 : index
    %187 = memref.load %arg9[%c0_110, %c0_111] : memref<1x1xf32, #tpu.memory_space<smem>>
    %188 = tpu.concatenate %185, %185 in 1 : vector<8x256xf32>, vector<8x256xf32> -> vector<8x512xf32>
    %189 = vector.extract_strided_slice %188 {offsets = [0, 239], sizes = [8, 256], strides = [1, 1]} : vector<8x512xf32> to vector<8x256xf32>
    %c0_112 = arith.constant 0 : index
    %c0_113 = arith.constant 0 : index
    %c0_114 = arith.constant 0 : index
    %190 = vector.load %arg3[%c0_112, %c0_113, %c0_114] : memref<9x1x256xf32, #tpu.memory_space<vmem>>, vector<1x1x256xf32>
    %191 = vector.shape_cast %190 : vector<1x1x256xf32> to vector<1x256xf32>
    %192 = vector.broadcast %191 : vector<1x256xf32> to vector<8x256xf32>
    %193 = arith.mulf %189, %192 : vector<8x256xf32>
    %194 = vector.extract_strided_slice %188 {offsets = [0, 240], sizes = [8, 256], strides = [1, 1]} : vector<8x512xf32> to vector<8x256xf32>
    %c1_115 = arith.constant 1 : index
    %c0_116 = arith.constant 0 : index
    %c0_117 = arith.constant 0 : index
    %195 = vector.load %arg3[%c1_115, %c0_116, %c0_117] : memref<9x1x256xf32, #tpu.memory_space<vmem>>, vector<1x1x256xf32>
    %196 = vector.shape_cast %195 : vector<1x1x256xf32> to vector<1x256xf32>
    %197 = vector.broadcast %196 : vector<1x256xf32> to vector<8x256xf32>
    %198 = arith.mulf %194, %197 : vector<8x256xf32>
    %199 = vector.extract_strided_slice %188 {offsets = [0, 241], sizes = [8, 256], strides = [1, 1]} : vector<8x512xf32> to vector<8x256xf32>
    %c2_118 = arith.constant 2 : index
    %c0_119 = arith.constant 0 : index
    %c0_120 = arith.constant 0 : index
    %200 = vector.load %arg3[%c2_118, %c0_119, %c0_120] : memref<9x1x256xf32, #tpu.memory_space<vmem>>, vector<1x1x256xf32>
    %201 = vector.shape_cast %200 : vector<1x1x256xf32> to vector<1x256xf32>
    %202 = vector.broadcast %201 : vector<1x256xf32> to vector<8x256xf32>
    %203 = arith.mulf %199, %202 : vector<8x256xf32>
    %204 = vector.extract_strided_slice %188 {offsets = [0, 255], sizes = [8, 256], strides = [1, 1]} : vector<8x512xf32> to vector<8x256xf32>
    %c3_121 = arith.constant 3 : index
    %c0_122 = arith.constant 0 : index
    %c0_123 = arith.constant 0 : index
    %205 = vector.load %arg3[%c3_121, %c0_122, %c0_123] : memref<9x1x256xf32, #tpu.memory_space<vmem>>, vector<1x1x256xf32>
    %206 = vector.shape_cast %205 : vector<1x1x256xf32> to vector<1x256xf32>
    %207 = vector.broadcast %206 : vector<1x256xf32> to vector<8x256xf32>
    %208 = arith.mulf %204, %207 : vector<8x256xf32>
    %209 = vector.extract_strided_slice %188 {offsets = [0, 0], sizes = [8, 256], strides = [1, 1]} : vector<8x512xf32> to vector<8x256xf32>
    %c4_124 = arith.constant 4 : index
    %c0_125 = arith.constant 0 : index
    %c0_126 = arith.constant 0 : index
    %210 = vector.load %arg3[%c4_124, %c0_125, %c0_126] : memref<9x1x256xf32, #tpu.memory_space<vmem>>, vector<1x1x256xf32>
    %211 = vector.shape_cast %210 : vector<1x1x256xf32> to vector<1x256xf32>
    %212 = vector.broadcast %211 : vector<1x256xf32> to vector<8x256xf32>
    %213 = arith.mulf %209, %212 : vector<8x256xf32>
    %214 = vector.extract_strided_slice %188 {offsets = [0, 1], sizes = [8, 256], strides = [1, 1]} : vector<8x512xf32> to vector<8x256xf32>
    %c5_127 = arith.constant 5 : index
    %c0_128 = arith.constant 0 : index
    %c0_129 = arith.constant 0 : index
    %215 = vector.load %arg3[%c5_127, %c0_128, %c0_129] : memref<9x1x256xf32, #tpu.memory_space<vmem>>, vector<1x1x256xf32>
    %216 = vector.shape_cast %215 : vector<1x1x256xf32> to vector<1x256xf32>
    %217 = vector.broadcast %216 : vector<1x256xf32> to vector<8x256xf32>
    %218 = arith.mulf %214, %217 : vector<8x256xf32>
    %219 = vector.extract_strided_slice %188 {offsets = [0, 15], sizes = [8, 256], strides = [1, 1]} : vector<8x512xf32> to vector<8x256xf32>
    %c6_130 = arith.constant 6 : index
    %c0_131 = arith.constant 0 : index
    %c0_132 = arith.constant 0 : index
    %220 = vector.load %arg3[%c6_130, %c0_131, %c0_132] : memref<9x1x256xf32, #tpu.memory_space<vmem>>, vector<1x1x256xf32>
    %221 = vector.shape_cast %220 : vector<1x1x256xf32> to vector<1x256xf32>
    %222 = vector.broadcast %221 : vector<1x256xf32> to vector<8x256xf32>
    %223 = arith.mulf %219, %222 : vector<8x256xf32>
    %224 = vector.extract_strided_slice %188 {offsets = [0, 16], sizes = [8, 256], strides = [1, 1]} : vector<8x512xf32> to vector<8x256xf32>
    %c7_133 = arith.constant 7 : index
    %c0_134 = arith.constant 0 : index
    %c0_135 = arith.constant 0 : index
    %225 = vector.load %arg3[%c7_133, %c0_134, %c0_135] : memref<9x1x256xf32, #tpu.memory_space<vmem>>, vector<1x1x256xf32>
    %226 = vector.shape_cast %225 : vector<1x1x256xf32> to vector<1x256xf32>
    %227 = vector.broadcast %226 : vector<1x256xf32> to vector<8x256xf32>
    %228 = arith.mulf %224, %227 : vector<8x256xf32>
    %229 = vector.extract_strided_slice %188 {offsets = [0, 17], sizes = [8, 256], strides = [1, 1]} : vector<8x512xf32> to vector<8x256xf32>
    %c8_136 = arith.constant 8 : index
    %c0_137 = arith.constant 0 : index
    %c0_138 = arith.constant 0 : index
    %230 = vector.load %arg3[%c8_136, %c0_137, %c0_138] : memref<9x1x256xf32, #tpu.memory_space<vmem>>, vector<1x1x256xf32>
    %231 = vector.shape_cast %230 : vector<1x1x256xf32> to vector<1x256xf32>
    %232 = vector.broadcast %231 : vector<1x256xf32> to vector<8x256xf32>
    %233 = arith.mulf %229, %232 : vector<8x256xf32>
    %234 = tpu.concatenate %193, %198, %203, %208, %213, %218, %223, %228, %233 in 0 : vector<8x256xf32>, vector<8x256xf32>, vector<8x256xf32>, vector<8x256xf32>, vector<8x256xf32>, vector<8x256xf32>, vector<8x256xf32>, vector<8x256xf32>, vector<8x256xf32> -> vector<72x256xf32>
    %cst_139 = arith.constant dense<0.000000e+00> : vector<1x256xf32>
    %235 = tpu.matmul %186, %234, %cst_139 {dimension_numbers = #tpu.dot_dimension_numbers<[1], [0], [0], [1], [0, 0, 1, 1], [], []>} : vector<1x72xf32>, vector<72x256xf32>, vector<1x256xf32> -> vector<1x256xf32>
    %236 = vector.broadcast %187 : f32 to vector<1x256xf32>
    %237 = arith.addf %235, %236 : vector<1x256xf32>
    %238 = arith.addf %8, %237 : vector<1x256xf32>
    %c0_140 = arith.constant 0 : index
    %c0_141 = arith.constant 0 : index
    %c0_142 = arith.constant 0 : index
    %239 = vector.load %arg10[%c0_140, %c0_141, %c0_142] : memref<1x1x256xf32, #tpu.memory_space<vmem>>, vector<1x1x256xf32>
    %240 = vector.shape_cast %239 : vector<1x1x256xf32> to vector<1x256xf32>
    %241 = vector.shape_cast %238 : vector<1x256xf32> to vector<1x1x256xf32>
    tpu.vector_store %arg10[%c0_140, %c0_141, %c0_142], %241 {strides = array<i32>} : memref<1x1x256xf32, #tpu.memory_space<vmem>>, vector<1x1x256xf32>,
    return
  }
  func.func @transform_0(%arg0: i32) -> (i32, i32, i32) {
    %c0_i32 = arith.constant 0 : i32
    %c0_i32_0 = arith.constant 0 : i32
    %c0_i32_1 = arith.constant 0 : i32
    return %arg0, %c0_i32, %c0_i32_0 : i32, i32, i32
  }
  func.func @transform_1(%arg0: i32) -> (i32, i32, i32) {
    %c0_i32 = arith.constant 0 : i32
    %c0_i32_0 = arith.constant 0 : i32
    %c0_i32_1 = arith.constant 0 : i32
    return %arg0, %c0_i32, %c0_i32_0 : i32, i32, i32
  }
  func.func @transform_2(%arg0: i32) -> (i32, i32, i32) {
    %c0_i32 = arith.constant 0 : i32
    %c0_i32_0 = arith.constant 0 : i32
    %c0_i32_1 = arith.constant 0 : i32
    %c0_i32_2 = arith.constant 0 : i32
    return %c0_i32, %c0_i32_0, %c0_i32_1 : i32, i32, i32
  }
  func.func @transform_3(%arg0: i32) -> (i32, i32) {
    %c0_i32 = arith.constant 0 : i32
    %c0_i32_0 = arith.constant 0 : i32
    %c0_i32_1 = arith.constant 0 : i32
    return %c0_i32, %c0_i32_0 : i32, i32
  }
  func.func @transform_4(%arg0: i32) -> (i32, i32) {
    %c0_i32 = arith.constant 0 : i32
    %c0_i32_0 = arith.constant 0 : i32
    %c0_i32_1 = arith.constant 0 : i32
    return %c0_i32, %c0_i32_0 : i32, i32
  }
  func.func @transform_5(%arg0: i32) -> (i32, i32, i32) {
    %c0_i32 = arith.constant 0 : i32
    %c0_i32_0 = arith.constant 0 : i32
    %c0_i32_1 = arith.constant 0 : i32
    %c0_i32_2 = arith.constant 0 : i32
    return %c0_i32, %c0_i32_0, %c0_i32_1 : i32, i32, i32
  }
  func.func @transform_6(%arg0: i32) -> (i32, i32, i32) {
    %c0_i32 = arith.constant 0 : i32
    %c0_i32_0 = arith.constant 0 : i32
    %c0_i32_1 = arith.constant 0 : i32
    %c0_i32_2 = arith.constant 0 : i32
    return %c0_i32, %c0_i32_0, %c0_i32_1 : i32, i32, i32
  }
  func.func @transform_7(%arg0: i32) -> (i32, i32) {
    %c0_i32 = arith.constant 0 : i32
    %c0_i32_0 = arith.constant 0 : i32
    %c0_i32_1 = arith.constant 0 : i32
    return %c0_i32, %c0_i32_0 : i32, i32
  }
  func.func @transform_8(%arg0: i32) -> (i32, i32) {
    %c0_i32 = arith.constant 0 : i32
    %c0_i32_0 = arith.constant 0 : i32
    %c0_i32_1 = arith.constant 0 : i32
    return %c0_i32, %c0_i32_0 : i32, i32
  }
  func.func @transform_9(%arg0: i32) -> (i32, i32, i32) {
    %c0_i32 = arith.constant 0 : i32
    %c0_i32_0 = arith.constant 0 : i32
    %c0_i32_1 = arith.constant 0 : i32
    return %arg0, %c0_i32, %c0_i32_0 : i32, i32, i32
  }
}

</mosaic_0001>

<llo_original>
// kernel: squeeze.1
$region0: #{squeeze.1}
  %s0 = inlined_call_operand.vmem [shape: f32[2,256], index: 0, kind: input, shape index: {}]
  %s1 = inlined_call_operand.hbm [shape: f32[2,1,16,16], index: 1, kind: output, shape index: {}]
  $region1: #{squeeze.1} parent=0
    #allocation0 [shape = 'u8[16384]{0}', space=vmem, size = 0x4000, scoped, tag = 'operand span for operand 1']
    #allocation1 [shape = 's32[1]{0}', space=sflag, size = 0x4, scoped, tag = 'scoped memory for squeeze.1']
    #allocation2 [shape = 'u8[8192]{0}', space=vmem, size = 0x2000, scoped, tag = 'scoped mem for input reshape']
    %2 = vsyncpa [#allocation1], 0
    %s4 = sshllo.u32 0, 2
    %s5 = scalar_lea.vmem %s0, 2
    %v6 = vld [vmem:[%s5] sm:%s4]
    %s7 = scalar_lea.vmem [#allocation2], 8
    %8 = vst [vmem:[%s7] sm:%s4] %v6
    %v9 = vld [vmem:[%s0] sm:%s4]
    %10 = vst [vmem:[#allocation2] sm:%s4] %v9
    %v11 = vld [vmem:[#allocation2] sm:$0x3]
    %vm12 = vcmask 130048
    %13 = vst.msk [vmem:[#allocation0] ss:$16 sm:$0x3] %vm12, %v11
    %s14 = scalar_lea.vmem [#allocation2], 8
    %v15 = vld [vmem:[%s14] sm:$0x3]
    %vm16 = vcmask 130048
    %s17 = scalar_lea.vmem [#allocation0], 8
    %18 = vst.msk [vmem:[%s17] ss:$16 sm:$0x3] %vm16, %v15
    %v19 = vld.sshfl [vmem:[#allocation2] sm:$0xff pattern:$0x99999180]
    %20 = vrot.lane.b32.xlu0 %v19, 112
    %v21 = vpop.permute.xlu0 %20
    %vm22 = vcmask 130048
    %s23 = scalar_lea.vmem [#allocation0], 1
    %24 = vst.msk [vmem:[%s23] ss:$8 sm:$0xf] %vm22, %v21
    %v25 = vld.sshfl [vmem:[#allocation2] sm:$0xff pattern:$0x99999180]
    %26 = vrot.lane.b32.xlu0 %v25, 96
    %v27 = vpop.permute.xlu0 %26
    %vm28 = vcmask 130048
    %s29 = scalar_lea.vmem [#allocation0], 2
    %30 = vst.msk [vmem:[%s29] ss:$8 sm:$0xf] %vm28, %v27
    %v31 = vld.sshfl [vmem:[#allocation2] sm:$0xff pattern:$0x99999180]
    %32 = vrot.lane.b32.xlu0 %v31, 80
    %v33 = vpop.permute.xlu0 %32
    %vm34 = vcmask 130048
    %s35 = scalar_lea.vmem [#allocation0], 3
    %36 = vst.msk [vmem:[%s35] ss:$8 sm:$0xf] %vm34, %v33
    %v37 = vld.sshfl [vmem:[#allocation2] sm:$0xff pattern:$0x99999180]
    %38 = vrot.lane.b32.xlu0 %v37, 64
    %v39 = vpop.permute.xlu0 %38
    %vm40 = vcmask 130048
    %s41 = scalar_lea.vmem [#allocation0], 4
    %42 = vst.msk [vmem:[%s41] ss:$8 sm:$0xf] %vm40, %v39
    %v43 = vld.sshfl [vmem:[#allocation2] sm:$0xff pattern:$0x99999180]
    %44 = vrot.lane.b32.xlu0 %v43, 48
    %v45 = vpop.permute.xlu0 %44
    %vm46 = vcmask 130048
    %s47 = scalar_lea.vmem [#allocation0], 5
    %48 = vst.msk [vmem:[%s47] ss:$8 sm:$0xf] %vm46, %v45
    %v49 = vld.sshfl [vmem:[#allocation2] sm:$0xff pattern:$0x99999180]
    %50 = vrot.lane.b32.xlu0 %v49, 32
    %v51 = vpop.permute.xlu0 %50
    %vm52 = vcmask 130048
    %s53 = scalar_lea.vmem [#allocation0], 6
    %54 = vst.msk [vmem:[%s53] ss:$8 sm:$0xf] %vm52, %v51
    %v55 = vld.sshfl [vmem:[#allocation2] sm:$0xff pattern:$0x99999180]
    %56 = vrot.lane.b32.xlu0 %v55, 16
    %v57 = vpop.permute.xlu0 %56
    %vm58 = vcmask 130048
    %s59 = scalar_lea.vmem [#allocation0], 7
    %60 = vst.msk [vmem:[%s59] ss:$8 sm:$0xf] %vm58, %v57
    %s62 = ssub.s32 512, 512
    %63 = vsyncadd [#allocation1], %s62
    %s65 = sshll.u32 [#allocation0], 4
    %s66 = int_to_ptr.vmem [resolvable:$true] %s65
    %68 = dma.vmem_to_hbm [thread:$0]  %s66, 512, %s1, [#allocation1]
    %69 = dma.done [#allocation1], 512
    %70 = vsyncpa [#allocation1], 1

// kernel: ra_forward.1
$region0: #{ra_forward.1}
  #allocation0 [shape = 'u32[]', space=smem, size = 0x4, offset = 0x4, fixed_abs, tag = 'smem constant byte address 0x4 - core index']
  #allocation1 [shape = 'u32[144,128]{1,0:T(1,128)}', space=vmem, size = 0x12000, scoped, tag = 'internal scratch']
  #allocation2 [shape = 'f32[1,1]{1,0:T(1,128)S(6)}', space=smem, size = 0x200, scoped, tag = 'scoped memory for ra_forward.1']
  %s0 = inlined_call_operand.vmem [shape: bf16[2,4,256], index: 0, kind: input, shape index: {}]
  %s1 = inlined_call_operand.vmem [shape: f32[2,1,256], index: 1, kind: input, shape index: {}]
  %s2 = inlined_call_operand.vmem [shape: f32[9,1,256], index: 2, kind: input, shape index: {}]
  %s3 = inlined_call_operand.vmem [shape: bf16[8,4], index: 3, kind: input, shape index: {}]
  %s4 = inlined_call_operand.vmem [shape: f32[8,1], index: 4, kind: input, shape index: {}]
  %s5 = inlined_call_operand.vmem [shape: f32[3,8,72], index: 5, kind: input, shape index: {}]
  %s6 = inlined_call_operand.vmem [shape: f32[3,8,1], index: 6, kind: input, shape index: {}]
  %s7 = inlined_call_operand.vmem [shape: f32[1,72], index: 7, kind: input, shape index: {}]
  %s8 = inlined_call_operand.<no memory space> [shape: f32[1,1], index: 8, kind: input, shape index: {}]
  %s9 = inlined_call_operand.vmem [shape: f32[2,1,256], index: 9, kind: output, shape index: {}]
  %s10 = sld [smem:[#allocation0]]
  $region69: #{ra_forward.1} parent=0
    _
  %s12 = ssub.s32 1, %s10
  %s13 = scalar_select 0, %s12, %s10
  %14 = sst [smem:[#allocation2]] %s8
  loop: start=0, step=1, limit=4
  $region2: #{ra_forward.1} parent=0 // loop_pre_header
    _
  $region3: #{ra_forward.1} parent=0 // loop_header
    %s16 = sphi 0, %s20
    %p17 = scmp.ge.s32.totalorder %s16, 4
    %s26 = sphi 0, %s28
    %s29 = sphi 0, %s26
    %s30 = sphi 0, %s29
    %s46 = sphi 0, %s30
    %s52 = sphi 0, %s54
    %s55 = sphi 0, %s52
    %s56 = sphi 0, %s55
    %s72 = sphi 0, %s56
    %s76 = sphi 0, %s76
    %s78 = sphi 0, %s76
    %s79 = sphi 0, %s78
    %s93 = sphi 0, %s79
    %s97 = sphi 0, %s97
    %s99 = sphi 0, %s97
    %s100 = sphi 0, %s99
    %s114 = sphi 0, %s100
    %s118 = sphi 0, %s118
    %s120 = sphi 0, %s118
    %s121 = sphi 0, %s120
    %s135 = sphi 0, %s121
    %s139 = sphi 0, %s139
    %s141 = sphi 0, %s139
    %s142 = sphi 0, %s141
    %s156 = sphi 0, %s142
    %s160 = sphi 0, %s160
    %s162 = sphi 0, %s160
    %s163 = sphi 0, %s162
    %s177 = sphi 0, %s163
    %s181 = sphi 0, %s181
    %s183 = sphi 0, %s181
    %s184 = sphi 0, %s183
    %s198 = sphi 0, %s184
    %s202 = sphi 0, %s202
    %s204 = sphi 0, %s202
    %s205 = sphi 0, %s204
    %s219 = sphi 0, %s205
    %s225 = sphi 0, %s227
    %s228 = sphi 0, %s225
    %s229 = sphi 0, %s228
    %s245 = sphi 0, %s229
  $region4: #{ra_forward.1} parent=0 // loop_header_branch
    %19 = sbr.rel (%p17) target = $region8
  $region5: #{ra_forward.1} parent=0 // loop_body
    %s21 = ssub.s32 %s16, 1
    %s22 = ssub.s32 %s16, 2
    %s23 = sadd.s32 %s16, 1
    %s24 = ssub.s32 %s16, %s23
    %p25 = scmp.eq.s32.totalorder %s24, 0
    %s27 = sadd.s32 %s26, 1
    %s28 = scalar_select %p25, %s26, %s27
    %p31 = pneg %p25
    %p32 = scmp.eq.s32.totalorder %s16, 1
    %p33 = por %p31, %p32
    %p34 = scmp.ne.s32.totalorder %s26, %s29
    %p35 = scmp.eq.s32.totalorder %s16, 0
    %p36 = por %p34, %p35
    %p37 = scmp.ne.s32.totalorder %s26, %s29
    %p38 = scmp.eq.s32.totalorder %s21, 1
    %p39 = por %p37, %p38
    %p40 = scmp.ne.s32.totalorder %s29, %s30
    %p41 = scmp.eq.s32.totalorder %s21, 0
    %p42 = por %p40, %p41
    %p43 = scmp.ne.s32.totalorder %s29, %s30
    %p44 = scmp.eq.s32.totalorder %s22, 1
    %p45 = por %p43, %p44
    %p47 = scmp.ne.s32.totalorder %s30, %s46
    %p48 = scmp.eq.s32.totalorder %s22, 0
    %p49 = por %p47, %p48
    %s50 = ssub.s32 %s16, %s23
    %p51 = scmp.eq.s32.totalorder %s50, 0
    %s53 = sadd.s32 %s52, 1
    %s54 = scalar_select %p51, %s52, %s53
    %p57 = pneg %p51
    %p58 = scmp.eq.s32.totalorder %s16, 1
    %p59 = por %p57, %p58
    %p60 = scmp.ne.s32.totalorder %s52, %s55
    %p61 = scmp.eq.s32.totalorder %s16, 0
    %p62 = por %p60, %p61
    %p63 = scmp.ne.s32.totalorder %s52, %s55
    %p64 = scmp.eq.s32.totalorder %s21, 1
    %p65 = por %p63, %p64
    %p66 = scmp.ne.s32.totalorder %s55, %s56
    %p67 = scmp.eq.s32.totalorder %s21, 0
    %p68 = por %p66, %p67
    %p69 = scmp.ne.s32.totalorder %s55, %s56
    %p70 = scmp.eq.s32.totalorder %s22, 1
    %p71 = por %p69, %p70
    %p73 = scmp.ne.s32.totalorder %s56, %s72
    %p74 = scmp.eq.s32.totalorder %s22, 0
    %p75 = por %p73, %p74
    %s77 = sadd.s32 %s76, 1
    %p80 = scmp.eq.s32.totalorder %s16, 1
    %p81 = scmp.ne.s32.totalorder %s76, %s78
    %p82 = scmp.eq.s32.totalorder %s16, 0
    %p83 = por %p81, %p82
    %p84 = scmp.ne.s32.totalorder %s76, %s78
    %p85 = scmp.eq.s32.totalorder %s21, 1
    %p86 = por %p84, %p85
    %p87 = scmp.ne.s32.totalorder %s78, %s79
    %p88 = scmp.eq.s32.totalorder %s21, 0
    %p89 = por %p87, %p88
    %p90 = scmp.ne.s32.totalorder %s78, %s79
    %p91 = scmp.eq.s32.totalorder %s22, 1
    %p92 = por %p90, %p91
    %p94 = scmp.ne.s32.totalorder %s79, %s93
    %p95 = scmp.eq.s32.totalorder %s22, 0
    %p96 = por %p94, %p95
    %s98 = sadd.s32 %s97, 1
    %p101 = scmp.eq.s32.totalorder %s16, 1
    %p102 = scmp.ne.s32.totalorder %s97, %s99
    %p103 = scmp.eq.s32.totalorder %s16, 0
    %p104 = por %p102, %p103
    %p105 = scmp.ne.s32.totalorder %s97, %s99
    %p106 = scmp.eq.s32.totalorder %s21, 1
    %p107 = por %p105, %p106
    %p108 = scmp.ne.s32.totalorder %s99, %s100
    %p109 = scmp.eq.s32.totalorder %s21, 0
    %p110 = por %p108, %p109
    %p111 = scmp.ne.s32.totalorder %s99, %s100
    %p112 = scmp.eq.s32.totalorder %s22, 1
    %p113 = por %p111, %p112
    %p115 = scmp.ne.s32.totalorder %s100, %s114
    %p116 = scmp.eq.s32.totalorder %s22, 0
    %p117 = por %p115, %p116
    %s119 = sadd.s32 %s118, 1
    %p122 = scmp.eq.s32.totalorder %s16, 1
    %p123 = scmp.ne.s32.totalorder %s118, %s120
    %p124 = scmp.eq.s32.totalorder %s16, 0
    %p125 = por %p123, %p124
    %p126 = scmp.ne.s32.totalorder %s118, %s120
    %p127 = scmp.eq.s32.totalorder %s21, 1
    %p128 = por %p126, %p127
    %p129 = scmp.ne.s32.totalorder %s120, %s121
    %p130 = scmp.eq.s32.totalorder %s21, 0
    %p131 = por %p129, %p130
    %p132 = scmp.ne.s32.totalorder %s120, %s121
    %p133 = scmp.eq.s32.totalorder %s22, 1
    %p134 = por %p132, %p133
    %p136 = scmp.ne.s32.totalorder %s121, %s135
    %p137 = scmp.eq.s32.totalorder %s22, 0
    %p138 = por %p136, %p137
    %s140 = sadd.s32 %s139, 1
    %p143 = scmp.eq.s32.totalorder %s16, 1
    %p144 = scmp.ne.s32.totalorder %s139, %s141
    %p145 = scmp.eq.s32.totalorder %s16, 0
    %p146 = por %p144, %p145
    %p147 = scmp.ne.s32.totalorder %s139, %s141
    %p148 = scmp.eq.s32.totalorder %s21, 1
    %p149 = por %p147, %p148
    %p150 = scmp.ne.s32.totalorder %s141, %s142
    %p151 = scmp.eq.s32.totalorder %s21, 0
    %p152 = por %p150, %p151
    %p153 = scmp.ne.s32.totalorder %s141, %s142
    %p154 = scmp.eq.s32.totalorder %s22, 1
    %p155 = por %p153, %p154
    %p157 = scmp.ne.s32.totalorder %s142, %s156
    %p158 = scmp.eq.s32.totalorder %s22, 0
    %p159 = por %p157, %p158
    %s161 = sadd.s32 %s160, 1
    %p164 = scmp.eq.s32.totalorder %s16, 1
    %p165 = scmp.ne.s32.totalorder %s160, %s162
    %p166 = scmp.eq.s32.totalorder %s16, 0
    %p167 = por %p165, %p166
    %p168 = scmp.ne.s32.totalorder %s160, %s162
    %p169 = scmp.eq.s32.totalorder %s21, 1
    %p170 = por %p168, %p169
    %p171 = scmp.ne.s32.totalorder %s162, %s163
    %p172 = scmp.eq.s32.totalorder %s21, 0
    %p173 = por %p171, %p172
    %p174 = scmp.ne.s32.totalorder %s162, %s163
    %p175 = scmp.eq.s32.totalorder %s22, 1
    %p176 = por %p174, %p175
    %p178 = scmp.ne.s32.totalorder %s163, %s177
    %p179 = scmp.eq.s32.totalorder %s22, 0
    %p180 = por %p178, %p179
    %s182 = sadd.s32 %s181, 1
    %p185 = scmp.eq.s32.totalorder %s16, 1
    %p186 = scmp.ne.s32.totalorder %s181, %s183
    %p187 = scmp.eq.s32.totalorder %s16, 0
    %p188 = por %p186, %p187
    %p189 = scmp.ne.s32.totalorder %s181, %s183
    %p190 = scmp.eq.s32.totalorder %s21, 1
    %p191 = por %p189, %p190
    %p192 = scmp.ne.s32.totalorder %s183, %s184
    %p193 = scmp.eq.s32.totalorder %s21, 0
    %p194 = por %p192, %p193
    %p195 = scmp.ne.s32.totalorder %s183, %s184
    %p196 = scmp.eq.s32.totalorder %s22, 1
    %p197 = por %p195, %p196
    %p199 = scmp.ne.s32.totalorder %s184, %s198
    %p200 = scmp.eq.s32.totalorder %s22, 0
    %p201 = por %p199, %p200
    %s203 = sadd.s32 %s202, 1
    %p206 = scmp.eq.s32.totalorder %s16, 1
    %p207 = scmp.ne.s32.totalorder %s202, %s204
    %p208 = scmp.eq.s32.totalorder %s16, 0
    %p209 = por %p207, %p208
    %p210 = scmp.ne.s32.totalorder %s202, %s204
    %p211 = scmp.eq.s32.totalorder %s21, 1
    %p212 = por %p210, %p211
    %p213 = scmp.ne.s32.totalorder %s204, %s205
    %p214 = scmp.eq.s32.totalorder %s21, 0
    %p215 = por %p213, %p214
    %p216 = scmp.ne.s32.totalorder %s204, %s205
    %p217 = scmp.eq.s32.totalorder %s22, 1
    %p218 = por %p216, %p217
    %p220 = scmp.ne.s32.totalorder %s205, %s219
    %p221 = scmp.eq.s32.totalorder %s22, 0
    %p222 = por %p220, %p221
    %s223 = ssub.s32 %s16, %s23
    %p224 = scmp.eq.s32.totalorder %s223, 0
    %s226 = sadd.s32 %s225, 1
    %s227 = scalar_select %p224, %s225, %s226
    %p230 = pneg %p224
    %p231 = scmp.eq.s32.totalorder %s16, 1
    %p232 = por %p230, %p231
    %p233 = scmp.ne.s32.totalorder %s225, %s228
    %p234 = scmp.eq.s32.totalorder %s16, 0
    %p235 = por %p233, %p234
    %p236 = scmp.ne.s32.totalorder %s225, %s228
    %p237 = scmp.eq.s32.totalorder %s21, 1
    %p238 = por %p236, %p237
    %p239 = scmp.ne.s32.totalorder %s228, %s229
    %p240 = scmp.eq.s32.totalorder %s21, 0
    %p241 = por %p239, %p240
    %p242 = scmp.ne.s32.totalorder %s228, %s229
    %p243 = scmp.eq.s32.totalorder %s22, 1
    %p244 = por %p242, %p243
    %p246 = scmp.ne.s32.totalorder %s229, %s245
    %p247 = scmp.eq.s32.totalorder %s22, 0
    %p248 = por %p246, %p247
    %p249 = scmp.le.s32.totalorder 1, %s16
    %p250 = scmp.lt.s32.totalorder %s16, 3
    %p251 = pnand %p249, %p250
    %p252 = pneg %p251
    // Predicated region
    $region9: #{ra_forward.1} parent=5 // pred_check
      _
    $region10: #{ra_forward.1} parent=5 // pred_check_branch
      %254 = sbr.rel (%p251) target = $region12
    $region11: #{ra_forward.1} parent=5 // pred_region
      %s255 = ssub.s32 %s16, 1
      // Predicated region
      $region13: #{ra_forward.1} parent=11 // pred_check
        %p256 = pneg %p89
      $region14: #{ra_forward.1} parent=11 // pred_check_branch
        %258 = sbr.rel (%p256) target = $region16
      $region15: #{ra_forward.1} parent=11 // pred_region
        _
      $region16: #{ra_forward.1} parent=11 // pred_fallthru
        _
      // Predicated region
      $region17: #{ra_forward.1} parent=11 // pred_check
        %p259 = pneg %p110
      $region18: #{ra_forward.1} parent=11 // pred_check_branch
        %261 = sbr.rel (%p259) target = $region20
      $region19: #{ra_forward.1} parent=11 // pred_region
        _
      $region20: #{ra_forward.1} parent=11 // pred_fallthru
        _
      // Predicated region
      $region21: #{ra_forward.1} parent=11 // pred_check
        %p262 = pneg %p131
      $region22: #{ra_forward.1} parent=11 // pred_check_branch
        %264 = sbr.rel (%p262) target = $region24
      $region23: #{ra_forward.1} parent=11 // pred_region
        _
      $region24: #{ra_forward.1} parent=11 // pred_fallthru
        _
      // Predicated region
      $region25: #{ra_forward.1} parent=11 // pred_check
        %p265 = pneg %p152
      $region26: #{ra_forward.1} parent=11 // pred_check_branch
        %267 = sbr.rel (%p265) target = $region28
      $region27: #{ra_forward.1} parent=11 // pred_region
        _
      $region28: #{ra_forward.1} parent=11 // pred_fallthru
        _
      // Predicated region
      $region29: #{ra_forward.1} parent=11 // pred_check
        %p268 = pneg %p173
      $region30: #{ra_forward.1} parent=11 // pred_check_branch
        %270 = sbr.rel (%p268) target = $region32
      $region31: #{ra_forward.1} parent=11 // pred_region
        _
      $region32: #{ra_forward.1} parent=11 // pred_fallthru
        _
      // Predicated region
      $region33: #{ra_forward.1} parent=11 // pred_check
        %p271 = pneg %p194
      $region34: #{ra_forward.1} parent=11 // pred_check_branch
        %273 = sbr.rel (%p271) target = $region36
      $region35: #{ra_forward.1} parent=11 // pred_region
        _
      $region36: #{ra_forward.1} parent=11 // pred_fallthru
        _
      // Predicated region
      $region37: #{ra_forward.1} parent=11 // pred_check
        %p274 = pneg %p215
      $region38: #{ra_forward.1} parent=11 // pred_check_branch
        %276 = sbr.rel (%p274) target = $region40
      $region39: #{ra_forward.1} parent=11 // pred_region
        _
      $region40: #{ra_forward.1} parent=11 // pred_fallthru
        _
    $region12: #{ra_forward.1} parent=5 // pred_fallthru
      _
    %p277 = scmp.lt.s32.totalorder %s16, 2
    // Predicated region
    $region41: #{ra_forward.1} parent=5 // pred_check
      %p278 = pneg %p277
    $region42: #{ra_forward.1} parent=5 // pred_check_branch
      %280 = sbr.rel (%p278) target = $region44
    $region43: #{ra_forward.1} parent=5 // pred_region
      // Predicated region
      $region45: #{ra_forward.1} parent=43 // pred_check
        %p281 = pneg %p36
      $region46: #{ra_forward.1} parent=43 // pred_check_branch
        %283 = sbr.rel (%p281) target = $region48
      $region47: #{ra_forward.1} parent=43 // pred_region
        %p284 = scmp.lt.s32.totalorder %s16, 1
        %s285 = scalar_select %p284, %s16, 1
        %s286 = smul.addr %s285, 2
        %s287 = smul.addr %s286, 2
        %s288 = scalar_lea.vmem %s0, %s287
      $region48: #{ra_forward.1} parent=43 // pred_fallthru
        _
      // Predicated region
      $region49: #{ra_forward.1} parent=43 // pred_check
        %p289 = pneg %p62
      $region50: #{ra_forward.1} parent=43 // pred_check_branch
        %291 = sbr.rel (%p289) target = $region52
      $region51: #{ra_forward.1} parent=43 // pred_region
        %p292 = scmp.lt.s32.totalorder %s16, 1
        %s293 = scalar_select %p292, %s16, 1
        %s294 = smul.addr %s293, 2
        %s295 = scalar_lea.vmem %s1, %s294
      $region52: #{ra_forward.1} parent=43 // pred_fallthru
        _
    $region44: #{ra_forward.1} parent=5 // pred_fallthru
      _
    %p296 = scmp.le.s32.totalorder 1, %s16
    %p297 = scmp.lt.s32.totalorder %s16, 3
    %p298 = pnand %p296, %p297
    %p299 = pneg %p298
    // Predicated region
    $region53: #{ra_forward.1} parent=5 // pred_check
      _
    $region54: #{ra_forward.1} parent=5 // pred_check_branch
      %301 = sbr.rel (%p298) target = $region56
    $region55: #{ra_forward.1} parent=5 // pred_region
      %s302 = ssub.s32 %s16, 1
      %p303 = scmp.lt.s32.totalorder %s21, 1
      %s304 = scalar_select %p303, %s21, 1
      %s305 = smul.addr %s304, 2
      %s306 = smul.addr %s305, 2
      %s307 = scalar_lea.vmem %s0, %s306
      %p308 = pneg %p42
      %p309 = pneg %p39
      %p310 = scmp.lt.s32.totalorder %s21, 1
      %s311 = scalar_select %p310, %s21, 1
      %s312 = smul.addr %s311, 2
      %s313 = scalar_lea.vmem %s1, %s312
      %p314 = pneg %p68
      %p315 = pneg %p65
      %p316 = pneg %p89
      %p317 = pneg %p86
      %p318 = pneg %p110
      %p319 = pneg %p107
      %p320 = pneg %p131
      %p321 = pneg %p128
      %p322 = pneg %p152
      %p323 = pneg %p149
      %p324 = pneg %p173
      %p325 = pneg %p170
      %p326 = pneg %p194
      %p327 = pneg %p191
      %p328 = pneg %p215
      %p329 = pneg %p212
      %p330 = pneg %p241
      %p331 = pneg %p238
      %p332 = scmp.lt.s32.totalorder %s21, 1
      %s333 = scalar_select %p332, %s21, 1
      %s334 = smul.addr %s333, 2
      %s335 = scalar_lea.vmem %s9, %s334
      %p336 = scmp.lt.s32.totalorder %s21, 1
      %s337 = scalar_select %p336, %s21, 1
      %s338 = smul.addr %s337, 2
      %s339 = smul.addr %s338, 2
      %s340 = scalar_lea.vmem %s0, %s339
      %p341 = scmp.lt.s32.totalorder %s21, 1
      %s342 = scalar_select %p341, %s21, 1
      %s343 = smul.addr %s342, 2
      %s344 = scalar_lea.vmem %s1, %s343
      %p345 = scmp.lt.s32.totalorder %s21, 1
      %s346 = scalar_select %p345, %s21, 1
      %s347 = smul.addr %s346, 2
      %s348 = scalar_lea.vmem %s9, %s347
      %v350 = vld [vmem:[%s3] sm:$0xf]
      %v351 = vld [vmem:[%s340] sm:$0xf]
      %v352 = vld [vmem:[%s4] sm:$0xff]
      %354 = vset.pattern.permute.xlu0 0
      %355 = vperm.xlu0 %354, %v352
      %v356 = vpop.permute.xlu0 %355
      %v360 = vunpack.c.l.s4 1983009808
      %v361 = vunpack.c.0.s8 %v360
      %v362 = vlaneseq
      %v363 = vshrl.u32 %v362, 7
      %v364 = vsub.s32 %v361, %v363
      %v365 = vrot.slane %v351, %v364
      %v366 = vcombine.high %v365, %v365
      %vm367 = vcmask 31744
      %v369 = vsel %vm367, %v350, 0
      %vm371 = vcmask 1041408
      %v373 = vsel %vm371, %v365, 0
      %v376 = vsel %vm371, %v366, 0
      %378 = vmatprep.subr.bf16.mxu0 %v376
      %379 = vmatpush1.bf16.msra.mxu0 %v373
      %380 = vmatprep.subr.bf16.mxu0 0
      %381 = vmatpush1.bf16.msra.mxu0 0
      %382 = vmatprep.subr.bf16.mxu0 0
      %383 = vmatpush1.bf16.msra.mxu0 0
      %384 = vmatprep.subr.bf16.mxu0 0
      %385 = vmatpush1.bf16.msra.mxu0 0
      %386 = vmatprep.subr.bf16.mxu0 0
      %387 = vmatpush1.bf16.msra.mxu0 0
      %388 = vmatprep.subr.bf16.mxu0 0
      %389 = vmatpush1.bf16.msra.mxu0 0
      %390 = vmatprep.subr.bf16.mxu0 0
      %391 = vmatpush1.bf16.msra.mxu0 0
      %392 = vmatprep.subr.bf16.mxu0 0
      %393 = vmatpush1.bf16.msra.mxu0 0
      %394 = vmatprep.subr.bf16.mxu0 0
      %395 = vmatpush1.bf16.msra.mxu0 0
      %396 = vmatprep.subr.bf16.mxu0 0
      %397 = vmatpush1.bf16.msra.mxu0 0
      %398 = vmatprep.subr.bf16.mxu0 0
      %399 = vmatpush1.bf16.msra.mxu0 0
      %400 = vmatprep.subr.bf16.mxu0 0
      %401 = vmatpush1.bf16.msra.mxu0 0
      %402 = vmatprep.subr.bf16.mxu0 0
      %403 = vmatpush1.bf16.msra.mxu0 0
      %404 = vmatprep.subr.bf16.mxu0 0
      %405 = vmatpush1.bf16.msra.mxu0 0
      %406 = vmatprep.subr.bf16.mxu0 0
      %407 = vmatpush1.bf16.msra.mxu0 0
      %408 = vmatprep.subr.bf16.mxu0 0
      %409 = vmatpush1.bf16.msra.mxu0 0
      %410 = vmatprep.mubr.bf16.mxu0 0
      %411 = vmatmul.mubr.bf16.gmra.mrb[0].mxu0 %v369
      %v412 = vpop.f32.mrb[0].mxu0
      %v413 = vadd.f32 %v356, %v412
      %v414 = vpop.f32.mrb[0].mxu0
      %v415 = vadd.f32 %v356, %v414
      %v416 = vpop.f32.mrb[0].mxu0
      %v417 = vpop.f32.mrb[0].mxu0
      %418 = vdwg.mxu0
      %v419 = vld [vmem:[%s344] sm:$0x3]
      %v420 = vsub.f32 0.0, %v419
      %v421 = vxor.u32 %v420, 2147483648
      %v422 = vmul.f32 %v421, 1.442695
      %v423 = vpow.pop %v422
      %v424 = vadd.f32 %v423, 1.0
      %v425 = vrcp.pop %v424
      %v426 = vmul.f32 1.0, %v425
      %v428 = vlaneseq
      %v429 = vshrl.u32 %v428, 7
      %v430 = vsub.s32 0, %v429
      %v431 = vrot.slane %v426, %v430
      %v432 = vlaneseq
      %v433 = vshrl.u32 %v432, 7
      %v434 = vsub.s32 1, %v433
      %v435 = vrot.slane %v426, %v434
      %v438 = vmul.f32 %v431, %v413
      %v439 = vmul.f32 %v435, %v415
      %v440 = vld [vmem:[%s5] sm:$0xff]
      %v441 = vld [vmem:[%s6] sm:$0xff]
      %v442 = vld [vmem:[%s2] sm:$0x3]
      %v444 = vlaneseq
      %v445 = vshrl.u32 %v444, 7
      %v446 = vsub.s32 0, %v445
      %v447 = vrot.slane %v442, %v446
      %v448 = vlaneseq
      %v449 = vshrl.u32 %v448, 7
      %v450 = vsub.s32 1, %v449
      %v451 = vrot.slane %v442, %v450
      %452 = vrot.lane.b32.xlu0 %v447, 111
      %v453 = vpop.permute.xlu0 %452
      %454 = vrot.lane.b32.xlu0 %v451, 111
      %v455 = vpop.permute.xlu0 %454
      %vm456 = vcmask 908288
      %v457 = vsel %vm456, %v453, %v455
      %v461 = vmul.f32 %v439, %v453
      %v462 = vmul.f32 %v438, %v457
      %v463 = vmul.f32 %v439, %v455
      %s464 = scalar_lea.vmem %s2, 2
      %v465 = vld [vmem:[%s464] sm:$0x3]
      %v467 = vlaneseq
      %v468 = vshrl.u32 %v467, 7
      %v469 = vsub.s32 0, %v468
      %v470 = vrot.slane %v465, %v469
      %v471 = vlaneseq
      %v472 = vshrl.u32 %v471, 7
      %v473 = vsub.s32 1, %v472
      %v474 = vrot.slane %v465, %v473
      %475 = vrot.lane.b32.xlu0 %v470, 112
      %v476 = vpop.permute.xlu0 %475
      %477 = vrot.lane.b32.xlu0 %v474, 112
      %v478 = vpop.permute.xlu0 %477
      %vm479 = vcmask 916480
      %v480 = vsel %vm479, %v476, %v478
      %v484 = vmul.f32 %v439, %v476
      %v485 = vmul.f32 %v438, %v480
      %v486 = vmul.f32 %v439, %v478
      %s487 = scalar_lea.vmem %s2, 4
      %v488 = vld [vmem:[%s487] sm:$0x3]
      %v490 = vlaneseq
      %v491 = vshrl.u32 %v490, 7
      %v492 = vsub.s32 0, %v491
      %v493 = vrot.slane %v488, %v492
      %v494 = vlaneseq
      %v495 = vshrl.u32 %v494, 7
      %v496 = vsub.s32 1, %v495
      %v497 = vrot.slane %v488, %v496
      %498 = vrot.lane.b32.xlu0 %v493, 113
      %v499 = vpop.permute.xlu0 %498
      %500 = vrot.lane.b32.xlu0 %v497, 113
      %v501 = vpop.permute.xlu0 %500
      %vm502 = vcmask 924672
      %v503 = vsel %vm502, %v499, %v501
      %v507 = vmul.f32 %v439, %v499
      %v508 = vmul.f32 %v438, %v503
      %v509 = vmul.f32 %v439, %v501
      %s510 = scalar_lea.vmem %s2, 6
      %v511 = vld [vmem:[%s510] sm:$0x3]
      %v513 = vlaneseq
      %v514 = vshrl.u32 %v513, 7
      %v515 = vsub.s32 0, %v514
      %v516 = vrot.slane %v511, %v515
      %v517 = vlaneseq
      %v518 = vshrl.u32 %v517, 7
      %v519 = vsub.s32 1, %v518
      %v520 = vrot.slane %v511, %v519
      %521 = vrot.lane.b32.xlu0 %v516, 127
      %v522 = vpop.permute.xlu0 %521
      %523 = vrot.lane.b32.xlu0 %v520, 127
      %v524 = vpop.permute.xlu0 %523
      %vm525 = vcmask 1039360
      %v526 = vsel %vm525, %v522, %v524
      %v530 = vmul.f32 %v439, %v522
      %v531 = vmul.f32 %v438, %v526
      %v532 = vmul.f32 %v439, %v524
      %s533 = scalar_lea.vmem %s2, 8
      %v534 = vld [vmem:[%s533] sm:$0x3]
      %v536 = vlaneseq
      %v537 = vshrl.u32 %v536, 7
      %v538 = vsub.s32 0, %v537
      %v539 = vrot.slane %v534, %v538
      %v540 = vlaneseq
      %v541 = vshrl.u32 %v540, 7
      %v542 = vsub.s32 1, %v541
      %v543 = vrot.slane %v534, %v542
      %v546 = vmul.f32 %v438, %v539
      %v547 = vmul.f32 %v439, %v543
      %s548 = scalar_lea.vmem %s2, 10
      %v549 = vld [vmem:[%s548] sm:$0x3]
      %v551 = vlaneseq
      %v552 = vshrl.u32 %v551, 7
      %v553 = vsub.s32 0, %v552
      %v554 = vrot.slane %v549, %v553
      %v555 = vlaneseq
      %v556 = vshrl.u32 %v555, 7
      %v557 = vsub.s32 1, %v556
      %v558 = vrot.slane %v549, %v557
      %559 = vrot.lane.b32.xlu0 %v554, 1
      %v560 = vpop.permute.xlu0 %559
      %561 = vrot.lane.b32.xlu0 %v558, 1
      %v562 = vpop.permute.xlu0 %561
      %vm563 = vcmask 7168
      %v564 = vsel %vm563, %v560, %v562
      %v568 = vmul.f32 %v438, %v560
      %v569 = vmul.f32 %v439, %v564
      %v570 = vmul.f32 %v438, %v562
      %s571 = scalar_lea.vmem %s2, 12
      %v572 = vld [vmem:[%s571] sm:$0x3]
      %v574 = vlaneseq
      %v575 = vshrl.u32 %v574, 7
      %v576 = vsub.s32 0, %v575
      %v577 = vrot.slane %v572, %v576
      %v578 = vlaneseq
      %v579 = vshrl.u32 %v578, 7
      %v580 = vsub.s32 1, %v579
      %v581 = vrot.slane %v572, %v580
      %582 = vrot.lane.b32.xlu0 %v577, 15
      %v583 = vpop.permute.xlu0 %582
      %584 = vrot.lane.b32.xlu0 %v581, 15
      %v585 = vpop.permute.xlu0 %584
      %vm586 = vcmask 121856
      %v587 = vsel %vm586, %v583, %v585
      %v591 = vmul.f32 %v438, %v583
      %v592 = vmul.f32 %v439, %v587
      %v593 = vmul.f32 %v438, %v585
      %s594 = scalar_lea.vmem %s2, 14
      %v595 = vld [vmem:[%s594] sm:$0x3]
      %v597 = vlaneseq
      %v598 = vshrl.u32 %v597, 7
      %v599 = vsub.s32 0, %v598
      %v600 = vrot.slane %v595, %v599
      %v601 = vlaneseq
      %v602 = vshrl.u32 %v601, 7
      %v603 = vsub.s32 1, %v602
      %v604 = vrot.slane %v595, %v603
      %605 = vrot.lane.b32.xlu0 %v600, 16
      %v606 = vpop.permute.xlu0 %605
      %607 = vrot.lane.b32.xlu0 %v604, 16
      %v608 = vpop.permute.xlu0 %607
      %vm609 = vcmask 130048
      %v610 = vsel %vm609, %v606, %v608
      %v614 = vmul.f32 %v438, %v606
      %v615 = vmul.f32 %v439, %v610
      %v616 = vmul.f32 %v438, %v608
      %s617 = scalar_lea.vmem %s2, 16
      %v618 = vld [vmem:[%s617] sm:$0x3]
      %v620 = vlaneseq
      %v621 = vshrl.u32 %v620, 7
      %v622 = vsub.s32 0, %v621
      %v623 = vrot.slane %v618, %v622
      %v624 = vlaneseq
      %v625 = vshrl.u32 %v624, 7
      %v626 = vsub.s32 1, %v625
      %v627 = vrot.slane %v618, %v626
      %628 = vrot.lane.b32.xlu0 %v623, 17
      %v629 = vpop.permute.xlu0 %628
      %630 = vrot.lane.b32.xlu0 %v627, 17
      %v631 = vpop.permute.xlu0 %630
      %vm632 = vcmask 138240
      %v633 = vsel %vm632, %v629, %v631
      %v637 = vmul.f32 %v438, %v629
      %v638 = vmul.f32 %v439, %v633
      %v639 = vmul.f32 %v438, %v631
      %643 = vrot.lane.b32.xlu0 %v484, 127
      %v644 = vpop.permute.xlu0 %643
      %645 = vrot.lane.b32.xlu0 %v485, 127
      %v646 = vpop.permute.xlu0 %645
      %647 = vrot.lane.b32.xlu0 %v486, 127
      %v648 = vpop.permute.xlu0 %647
      %v649 = vsel %vm525, %v644, %v646
      %v650 = vsel %vm525, %v646, %v648
      %654 = vrot.lane.b32.xlu0 %v507, 126
      %v655 = vpop.permute.xlu0 %654
      %656 = vrot.lane.b32.xlu0 %v508, 126
      %v657 = vpop.permute.xlu0 %656
      %658 = vrot.lane.b32.xlu0 %v509, 126
      %v659 = vpop.permute.xlu0 %658
      %vm660 = vcmask 1031168
      %v661 = vsel %vm660, %v655, %v657
      %v662 = vsel %vm660, %v657, %v659
      %666 = vrot.lane.b32.xlu0 %v530, 112
      %v667 = vpop.permute.xlu0 %666
      %668 = vrot.lane.b32.xlu0 %v531, 112
      %v669 = vpop.permute.xlu0 %668
      %670 = vrot.lane.b32.xlu0 %v532, 112
      %v671 = vpop.permute.xlu0 %670
      %v672 = vsel %vm479, %v667, %v669
      %v673 = vsel %vm479, %v669, %v671
      %676 = vrot.lane.b32.xlu0 %v546, 111
      %v677 = vpop.permute.xlu0 %676
      %678 = vrot.lane.b32.xlu0 %v547, 111
      %v679 = vpop.permute.xlu0 %678
      %v680 = vsel %vm456, %v677, %v679
      %684 = vrot.lane.b32.xlu0 %v568, 110
      %v685 = vpop.permute.xlu0 %684
      %686 = vrot.lane.b32.xlu0 %v569, 110
      %v687 = vpop.permute.xlu0 %686
      %688 = vrot.lane.b32.xlu0 %v570, 110
      %v689 = vpop.permute.xlu0 %688
      %vm690 = vcmask 900096
      %v691 = vsel %vm690, %v685, %v687
      %v692 = vsel %vm690, %v687, %v689
      %696 = vrot.lane.b32.xlu0 %v591, 96
      %v697 = vpop.permute.xlu0 %696
      %698 = vrot.lane.b32.xlu0 %v592, 96
      %v699 = vpop.permute.xlu0 %698
      %700 = vrot.lane.b32.xlu0 %v593, 96
      %v701 = vpop.permute.xlu0 %700
      %vm702 = vcmask 785408
      %v703 = vsel %vm702, %v697, %v699
      %v704 = vsel %vm702, %v699, %v701
      %708 = vrot.lane.b32.xlu0 %v614, 95
      %v709 = vpop.permute.xlu0 %708
      %710 = vrot.lane.b32.xlu0 %v615, 95
      %v711 = vpop.permute.xlu0 %710
      %712 = vrot.lane.b32.xlu0 %v616, 95
      %v713 = vpop.permute.xlu0 %712
      %vm714 = vcmask 777216
      %v715 = vsel %vm714, %v709, %v711
      %v716 = vsel %vm714, %v711, %v713
      %720 = vrot.lane.b32.xlu0 %v637, 94
      %v721 = vpop.permute.xlu0 %720
      %722 = vrot.lane.b32.xlu0 %v638, 94
      %v723 = vpop.permute.xlu0 %722
      %724 = vrot.lane.b32.xlu0 %v639, 94
      %v725 = vpop.permute.xlu0 %724
      %vm726 = vcmask 769024
      %v727 = vsel %vm726, %v721, %v723
      %v728 = vsel %vm726, %v723, %v725
      %730 = vset.pattern.permute.xlu0 0
      %731 = vperm.xlu0 %730, %v441
      %v732 = vpop.permute.xlu0 %731
      %737 = vrot.lane.b32.xlu0 %v461, 17
      %v738 = vpop.permute.xlu0 %737
      %739 = vrot.lane.b32.xlu0 %v462, 17
      %v740 = vpop.permute.xlu0 %739
      %741 = vrot.lane.b32.xlu0 %v463, 17
      %v742 = vpop.permute.xlu0 %741
      %743 = vrot.lane.b32.xlu0 %v649, 17
      %v744 = vpop.permute.xlu0 %743
      %745 = vrot.lane.b32.xlu0 %v650, 17
      %v746 = vpop.permute.xlu0 %745
      %747 = vrot.lane.b32.xlu0 %v648, 17
      %v748 = vpop.permute.xlu0 %747
      %749 = vrot.lane.b32.xlu0 %v661, 17
      %v750 = vpop.permute.xlu0 %749
      %751 = vrot.lane.b32.xlu0 %v662, 17
      %v752 = vpop.permute.xlu0 %751
      %753 = vrot.lane.b32.xlu0 %v659, 17
      %v754 = vpop.permute.xlu0 %753
      %755 = vrot.lane.b32.xlu0 %v672, 17
      %v756 = vpop.permute.xlu0 %755
      %757 = vrot.lane.b32.xlu0 %v673, 17
      %v758 = vpop.permute.xlu0 %757
      %759 = vrot.lane.b32.xlu0 %v671, 17
      %v760 = vpop.permute.xlu0 %759
      %761 = vrot.lane.b32.xlu0 %v677, 17
      %v762 = vpop.permute.xlu0 %761
      %763 = vrot.lane.b32.xlu0 %v680, 17
      %v764 = vpop.permute.xlu0 %763
      %765 = vrot.lane.b32.xlu0 %v679, 17
      %v766 = vpop.permute.xlu0 %765
      %767 = vrot.lane.b32.xlu0 %v685, 17
      %v768 = vpop.permute.xlu0 %767
      %769 = vrot.lane.b32.xlu0 %v691, 17
      %v770 = vpop.permute.xlu0 %769
      %771 = vrot.lane.b32.xlu0 %v692, 17
      %v772 = vpop.permute.xlu0 %771
      %773 = vrot.lane.b32.xlu0 %v697, 17
      %v774 = vpop.permute.xlu0 %773
      %775 = vrot.lane.b32.xlu0 %v703, 17
      %v776 = vpop.permute.xlu0 %775
      %777 = vrot.lane.b32.xlu0 %v704, 17
      %v778 = vpop.permute.xlu0 %777
      %779 = vrot.lane.b32.xlu0 %v709, 17
      %v780 = vpop.permute.xlu0 %779
      %781 = vrot.lane.b32.xlu0 %v715, 17
      %v782 = vpop.permute.xlu0 %781
      %783 = vrot.lane.b32.xlu0 %v716, 17
      %v784 = vpop.permute.xlu0 %783
      %785 = vrot.lane.b32.xlu0 %v721, 17
      %v786 = vpop.permute.xlu0 %785
      %787 = vrot.lane.b32.xlu0 %v727, 17
      %v788 = vpop.permute.xlu0 %787
      %789 = vrot.lane.b32.xlu0 %v728, 17
      %v790 = vpop.permute.xlu0 %789
      %v791 = vsel %vm632, %v738, %v740
      %v792 = vsel %vm632, %v740, %v742
      %v793 = vsel %vm632, %v744, %v746
      %v794 = vsel %vm632, %v746, %v748
      %v795 = vsel %vm632, %v750, %v752
      %v796 = vsel %vm632, %v752, %v754
      %v797 = vsel %vm632, %v756, %v758
      %v798 = vsel %vm632, %v758, %v760
      %v799 = vsel %vm632, %v762, %v764
      %v800 = vsel %vm632, %v764, %v766
      %v801 = vsel %vm632, %v768, %v770
      %v802 = vsel %vm632, %v770, %v772
      %v803 = vsel %vm632, %v774, %v776
      %v804 = vsel %vm632, %v776, %v778
      %v805 = vsel %vm632, %v780, %v782
      %v806 = vsel %vm632, %v782, %v784
      %v807 = vsel %vm632, %v786, %v788
      %v808 = vsel %vm632, %v788, %v790
      %vm827 = vcmask 588800
      %v829 = vsel %vm827, %v440, 0
      %831 = vmatprep.subr.mxu0 %v792
      %832 = vmatpush1.msra.mxu0 %v791
      %833 = vmatprep.subr.mxu0 %v794
      %834 = vmatpush1.msra.mxu0 %v793
      %835 = vmatprep.subr.mxu0 %v796
      %836 = vmatpush1.msra.mxu0 %v795
      %837 = vmatprep.subr.mxu0 %v798
      %838 = vmatpush1.msra.mxu0 %v797
      %839 = vmatprep.subr.mxu0 %v800
      %840 = vmatpush1.msra.mxu0 %v799
      %841 = vmatprep.subr.mxu0 %v802
      %842 = vmatpush1.msra.mxu0 %v801
      %843 = vmatprep.subr.mxu0 %v804
      %844 = vmatpush1.msra.mxu0 %v803
      %845 = vmatprep.subr.mxu0 %v806
      %846 = vmatpush1.msra.mxu0 %v805
      %847 = vmatprep.subr.mxu0 %v808
      %848 = vmatpush1.msra.mxu0 %v807
      %849 = vmatprep.subr.mxu0 0.0
      %850 = vmatpush1.msra.mxu0 0.0
      %851 = vmatprep.subr.mxu0 0.0
      %852 = vmatpush1.msra.mxu0 0.0
      %853 = vmatprep.subr.mxu0 0.0
      %854 = vmatpush1.msra.mxu0 0.0
      %855 = vmatprep.subr.mxu0 0.0
      %856 = vmatpush1.msra.mxu0 0.0
      %857 = vmatprep.subr.mxu0 0.0
      %858 = vmatpush1.msra.mxu0 0.0
      %859 = vmatprep.subr.mxu0 0.0
      %860 = vmatpush1.msra.mxu0 0.0
      %861 = vmatprep.subr.mxu0 0.0
      %862 = vmatpush1.msra.mxu0 0.0
      %863 = vmatprep.subr.mxu0 0.0
      %864 = vmatpush1.msra.mxu0 0.0
      %865 = vmatprep.subr.mxu0 0.0
      %866 = vmatpush1.msra.mxu0 0.0
      %867 = vmatprep.subr.mxu0 0.0
      %868 = vmatpush1.msra.mxu0 0.0
      %869 = vmatprep.subr.mxu0 0.0
      %870 = vmatpush1.msra.mxu0 0.0
      %871 = vmatprep.subr.mxu0 0.0
      %872 = vmatpush1.msra.mxu0 0.0
      %873 = vmatprep.subr.mxu0 0.0
      %874 = vmatpush1.msra.mxu0 0.0
      %875 = vmatprep.subr.mxu0 0.0
      %876 = vmatpush1.msra.mxu0 0.0
      %877 = vmatprep.subr.mxu0 0.0
      %878 = vmatpush1.msra.mxu0 0.0
      %879 = vmatprep.subr.mxu0 0.0
      %880 = vmatpush1.msra.mxu0 0.0
      %881 = vmatprep.subr.mxu0 0.0
      %882 = vmatpush1.msra.mxu0 0.0
      %883 = vmatprep.subr.mxu0 0.0
      %884 = vmatpush1.msra.mxu0 0.0
      %885 = vmatprep.subr.mxu0 0.0
      %886 = vmatpush1.msra.mxu0 0.0
      %887 = vmatprep.subr.mxu0 0.0
      %888 = vmatpush1.msra.mxu0 0.0
      %889 = vmatprep.subr.mxu0 0.0
      %890 = vmatpush1.msra.mxu0 0.0
      %891 = vmatprep.subr.mxu0 0.0
      %892 = vmatpush1.msra.mxu0 0.0
      %893 = vmatprep.subr.mxu0 0.0
      %894 = vmatpush1.msra.mxu0 0.0
      %895 = vmatprep.mubr.f32.mxu0 0.0
      %896 = vmatmul.mubr.f32.gmra.mrb[0].mxu0 %v829
      %v897 = vpop.f32.mrb[0].mxu0
      %v898 = vadd.f32 %v732, %v897
      %v899 = vpop.f32.mrb[0].mxu0
      %v900 = vadd.f32 %v732, %v899
      %901 = vdwg.mxu0
      %v902 = vmax.f32 %v898, 0.0
      %v903 = vmax.f32 %v900, 0.0
      %s904 = scalar_lea.vmem %s5, 8
      %v905 = vld [vmem:[%s904] sm:$0xff]
      %s906 = scalar_lea.vmem %s6, 8
      %v907 = vld [vmem:[%s906] sm:$0xff]
      %v908 = vmul.f32 %v903, %v453
      %v909 = vmul.f32 %v902, %v457
      %v910 = vmul.f32 %v903, %v455
      %v911 = vmul.f32 %v903, %v476
      %v912 = vmul.f32 %v902, %v480
      %v913 = vmul.f32 %v903, %v478
      %v914 = vmul.f32 %v903, %v499
      %v915 = vmul.f32 %v902, %v503
      %v916 = vmul.f32 %v903, %v501
      %v917 = vmul.f32 %v903, %v522
      %v918 = vmul.f32 %v902, %v526
      %v919 = vmul.f32 %v903, %v524
      %v920 = vmul.f32 %v902, %v539
      %v921 = vmul.f32 %v903, %v543
      %v922 = vmul.f32 %v902, %v560
      %v923 = vmul.f32 %v903, %v564
      %v924 = vmul.f32 %v902, %v562
      %v925 = vmul.f32 %v902, %v583
      %v926 = vmul.f32 %v903, %v587
      %v927 = vmul.f32 %v902, %v585
      %v928 = vmul.f32 %v902, %v606
      %v929 = vmul.f32 %v903, %v610
      %v930 = vmul.f32 %v902, %v608
      %v931 = vmul.f32 %v902, %v629
      %v932 = vmul.f32 %v903, %v633
      %v933 = vmul.f32 %v902, %v631
      %937 = vrot.lane.b32.xlu0 %v911, 127
      %v938 = vpop.permute.xlu0 %937
      %939 = vrot.lane.b32.xlu0 %v912, 127
      %v940 = vpop.permute.xlu0 %939
      %941 = vrot.lane.b32.xlu0 %v913, 127
      %v942 = vpop.permute.xlu0 %941
      %v943 = vsel %vm525, %v938, %v940
      %v944 = vsel %vm525, %v940, %v942
      %948 = vrot.lane.b32.xlu0 %v914, 126
      %v949 = vpop.permute.xlu0 %948
      %950 = vrot.lane.b32.xlu0 %v915, 126
      %v951 = vpop.permute.xlu0 %950
      %952 = vrot.lane.b32.xlu0 %v916, 126
      %v953 = vpop.permute.xlu0 %952
      %v954 = vsel %vm660, %v949, %v951
      %v955 = vsel %vm660, %v951, %v953
      %959 = vrot.lane.b32.xlu0 %v917, 112
      %v960 = vpop.permute.xlu0 %959
      %961 = vrot.lane.b32.xlu0 %v918, 112
      %v962 = vpop.permute.xlu0 %961
      %963 = vrot.lane.b32.xlu0 %v919, 112
      %v964 = vpop.permute.xlu0 %963
      %v965 = vsel %vm479, %v960, %v962
      %v966 = vsel %vm479, %v962, %v964
      %969 = vrot.lane.b32.xlu0 %v920, 111
      %v970 = vpop.permute.xlu0 %969
      %971 = vrot.lane.b32.xlu0 %v921, 111
      %v972 = vpop.permute.xlu0 %971
      %v973 = vsel %vm456, %v970, %v972
      %977 = vrot.lane.b32.xlu0 %v922, 110
      %v978 = vpop.permute.xlu0 %977
      %979 = vrot.lane.b32.xlu0 %v923, 110
      %v980 = vpop.permute.xlu0 %979
      %981 = vrot.lane.b32.xlu0 %v924, 110
      %v982 = vpop.permute.xlu0 %981
      %v983 = vsel %vm690, %v978, %v980
      %v984 = vsel %vm690, %v980, %v982
      %988 = vrot.lane.b32.xlu0 %v925, 96
      %v989 = vpop.permute.xlu0 %988
      %990 = vrot.lane.b32.xlu0 %v926, 96
      %v991 = vpop.permute.xlu0 %990
      %992 = vrot.lane.b32.xlu0 %v927, 96
      %v993 = vpop.permute.xlu0 %992
      %v994 = vsel %vm702, %v989, %v991
      %v995 = vsel %vm702, %v991, %v993
      %999 = vrot.lane.b32.xlu0 %v928, 95
      %v1000 = vpop.permute.xlu0 %999
      %1001 = vrot.lane.b32.xlu0 %v929, 95
      %v1002 = vpop.permute.xlu0 %1001
      %1003 = vrot.lane.b32.xlu0 %v930, 95
      %v1004 = vpop.permute.xlu0 %1003
      %v1005 = vsel %vm714, %v1000, %v1002
      %v1006 = vsel %vm714, %v1002, %v1004
      %1010 = vrot.lane.b32.xlu0 %v931, 94
      %v1011 = vpop.permute.xlu0 %1010
      %1012 = vrot.lane.b32.xlu0 %v932, 94
      %v1013 = vpop.permute.xlu0 %1012
      %1014 = vrot.lane.b32.xlu0 %v933, 94
      %v1015 = vpop.permute.xlu0 %1014
      %v1016 = vsel %vm726, %v1011, %v1013
      %v1017 = vsel %vm726, %v1013, %v1015
      %1019 = vset.pattern.permute.xlu0 0
      %1020 = vperm.xlu0 %1019, %v907
      %v1021 = vpop.permute.xlu0 %1020
      %1026 = vrot.lane.b32.xlu0 %v908, 17
      %v1027 = vpop.permute.xlu0 %1026
      %1028 = vrot.lane.b32.xlu0 %v909, 17
      %v1029 = vpop.permute.xlu0 %1028
      %1030 = vrot.lane.b32.xlu0 %v910, 17
      %v1031 = vpop.permute.xlu0 %1030
      %1032 = vrot.lane.b32.xlu0 %v943, 17
      %v1033 = vpop.permute.xlu0 %1032
      %1034 = vrot.lane.b32.xlu0 %v944, 17
      %v1035 = vpop.permute.xlu0 %1034
      %1036 = vrot.lane.b32.xlu0 %v942, 17
      %v1037 = vpop.permute.xlu0 %1036
      %1038 = vrot.lane.b32.xlu0 %v954, 17
      %v1039 = vpop.permute.xlu0 %1038
      %1040 = vrot.lane.b32.xlu0 %v955, 17
      %v1041 = vpop.permute.xlu0 %1040
      %1042 = vrot.lane.b32.xlu0 %v953, 17
      %v1043 = vpop.permute.xlu0 %1042
      %1044 = vrot.lane.b32.xlu0 %v965, 17
      %v1045 = vpop.permute.xlu0 %1044
      %1046 = vrot.lane.b32.xlu0 %v966, 17
      %v1047 = vpop.permute.xlu0 %1046
      %1048 = vrot.lane.b32.xlu0 %v964, 17
      %v1049 = vpop.permute.xlu0 %1048
      %1050 = vrot.lane.b32.xlu0 %v970, 17
      %v1051 = vpop.permute.xlu0 %1050
      %1052 = vrot.lane.b32.xlu0 %v973, 17
      %v1053 = vpop.permute.xlu0 %1052
      %1054 = vrot.lane.b32.xlu0 %v972, 17
      %v1055 = vpop.permute.xlu0 %1054
      %1056 = vrot.lane.b32.xlu0 %v978, 17
      %v1057 = vpop.permute.xlu0 %1056
      %1058 = vrot.lane.b32.xlu0 %v983, 17
      %v1059 = vpop.permute.xlu0 %1058
      %1060 = vrot.lane.b32.xlu0 %v984, 17
      %v1061 = vpop.permute.xlu0 %1060
      %1062 = vrot.lane.b32.xlu0 %v989, 17
      %v1063 = vpop.permute.xlu0 %1062
      %1064 = vrot.lane.b32.xlu0 %v994, 17
      %v1065 = vpop.permute.xlu0 %1064
      %1066 = vrot.lane.b32.xlu0 %v995, 17
      %v1067 = vpop.permute.xlu0 %1066
      %1068 = vrot.lane.b32.xlu0 %v1000, 17
      %v1069 = vpop.permute.xlu0 %1068
      %1070 = vrot.lane.b32.xlu0 %v1005, 17
      %v1071 = vpop.permute.xlu0 %1070
      %1072 = vrot.lane.b32.xlu0 %v1006, 17
      %v1073 = vpop.permute.xlu0 %1072
      %1074 = vrot.lane.b32.xlu0 %v1011, 17
      %v1075 = vpop.permute.xlu0 %1074
      %1076 = vrot.lane.b32.xlu0 %v1016, 17
      %v1077 = vpop.permute.xlu0 %1076
      %1078 = vrot.lane.b32.xlu0 %v1017, 17
      %v1079 = vpop.permute.xlu0 %1078
      %v1080 = vsel %vm632, %v1027, %v1029
      %v1081 = vsel %vm632, %v1029, %v1031
      %v1082 = vsel %vm632, %v1033, %v1035
      %v1083 = vsel %vm632, %v1035, %v1037
      %v1084 = vsel %vm632, %v1039, %v1041
      %v1085 = vsel %vm632, %v1041, %v1043
      %v1086 = vsel %vm632, %v1045, %v1047
      %v1087 = vsel %vm632, %v1047, %v1049
      %v1088 = vsel %vm632, %v1051, %v1053
      %v1089 = vsel %vm632, %v1053, %v1055
      %v1090 = vsel %vm632, %v1057, %v1059
      %v1091 = vsel %vm632, %v1059, %v1061
      %v1092 = vsel %vm632, %v1063, %v1065
      %v1093 = vsel %vm632, %v1065, %v1067
      %v1094 = vsel %vm632, %v1069, %v1071
      %v1095 = vsel %vm632, %v1071, %v1073
      %v1096 = vsel %vm632, %v1075, %v1077
      %v1097 = vsel %vm632, %v1077, %v1079
      %v1117 = vsel %vm827, %v905, 0
      %1119 = vmatprep.subr.mxu0 %v1081
      %1120 = vmatpush1.msra.mxu0 %v1080
      %1121 = vmatprep.subr.mxu0 %v1083
      %1122 = vmatpush1.msra.mxu0 %v1082
      %1123 = vmatprep.subr.mxu0 %v1085
      %1124 = vmatpush1.msra.mxu0 %v1084
      %1125 = vmatprep.subr.mxu0 %v1087
      %1126 = vmatpush1.msra.mxu0 %v1086
      %1127 = vmatprep.subr.mxu0 %v1089
      %1128 = vmatpush1.msra.mxu0 %v1088
      %1129 = vmatprep.subr.mxu0 %v1091
      %1130 = vmatpush1.msra.mxu0 %v1090
      %1131 = vmatprep.subr.mxu0 %v1093
      %1132 = vmatpush1.msra.mxu0 %v1092
      %1133 = vmatprep.subr.mxu0 %v1095
      %1134 = vmatpush1.msra.mxu0 %v1094
      %1135 = vmatprep.subr.mxu0 %v1097
      %1136 = vmatpush1.msra.mxu0 %v1096
      %1137 = vmatprep.subr.mxu0 0.0
      %1138 = vmatpush1.msra.mxu0 0.0
      %1139 = vmatprep.subr.mxu0 0.0
      %1140 = vmatpush1.msra.mxu0 0.0
      %1141 = vmatprep.subr.mxu0 0.0
      %1142 = vmatpush1.msra.mxu0 0.0
      %1143 = vmatprep.subr.mxu0 0.0
      %1144 = vmatpush1.msra.mxu0 0.0
      %1145 = vmatprep.subr.mxu0 0.0
      %1146 = vmatpush1.msra.mxu0 0.0
      %1147 = vmatprep.subr.mxu0 0.0
      %1148 = vmatpush1.msra.mxu0 0.0
      %1149 = vmatprep.subr.mxu0 0.0
      %1150 = vmatpush1.msra.mxu0 0.0
      %1151 = vmatprep.subr.mxu0 0.0
      %1152 = vmatpush1.msra.mxu0 0.0
      %1153 = vmatprep.subr.mxu0 0.0
      %1154 = vmatpush1.msra.mxu0 0.0
      %1155 = vmatprep.subr.mxu0 0.0
      %1156 = vmatpush1.msra.mxu0 0.0
      %1157 = vmatprep.subr.mxu0 0.0
      %1158 = vmatpush1.msra.mxu0 0.0
      %1159 = vmatprep.subr.mxu0 0.0
      %1160 = vmatpush1.msra.mxu0 0.0
      %1161 = vmatprep.subr.mxu0 0.0
      %1162 = vmatpush1.msra.mxu0 0.0
      %1163 = vmatprep.subr.mxu0 0.0
      %1164 = vmatpush1.msra.mxu0 0.0
      %1165 = vmatprep.subr.mxu0 0.0
      %1166 = vmatpush1.msra.mxu0 0.0
      %1167 = vmatprep.subr.mxu0 0.0
      %1168 = vmatpush1.msra.mxu0 0.0
      %1169 = vmatprep.subr.mxu0 0.0
      %1170 = vmatpush1.msra.mxu0 0.0
      %1171 = vmatprep.subr.mxu0 0.0
      %1172 = vmatpush1.msra.mxu0 0.0
      %1173 = vmatprep.subr.mxu0 0.0
      %1174 = vmatpush1.msra.mxu0 0.0
      %1175 = vmatprep.subr.mxu0 0.0
      %1176 = vmatpush1.msra.mxu0 0.0
      %1177 = vmatprep.subr.mxu0 0.0
      %1178 = vmatpush1.msra.mxu0 0.0
      %1179 = vmatprep.subr.mxu0 0.0
      %1180 = vmatpush1.msra.mxu0 0.0
      %1181 = vmatprep.subr.mxu0 0.0
      %1182 = vmatpush1.msra.mxu0 0.0
      %1183 = vmatprep.mubr.f32.mxu0 0.0
      %1184 = vmatmul.mubr.f32.gmra.mrb[0].mxu0 %v1117
      %v1185 = vpop.f32.mrb[0].mxu0
      %v1186 = vadd.f32 %v1021, %v1185
      %v1187 = vpop.f32.mrb[0].mxu0
      %v1188 = vadd.f32 %v1021, %v1187
      %1189 = vdwg.mxu0
      %v1190 = vmax.f32 %v1186, 0.0
      %v1191 = vmax.f32 %v1188, 0.0
      %s1192 = scalar_lea.vmem %s5, 16
      %v1193 = vld [vmem:[%s1192] sm:$0xff]
      %s1194 = scalar_lea.vmem %s6, 16
      %v1195 = vld [vmem:[%s1194] sm:$0xff]
      %v1196 = vmul.f32 %v1191, %v453
      %v1197 = vmul.f32 %v1190, %v457
      %v1198 = vmul.f32 %v1191, %v455
      %v1199 = vmul.f32 %v1191, %v476
      %v1200 = vmul.f32 %v1190, %v480
      %v1201 = vmul.f32 %v1191, %v478
      %v1202 = vmul.f32 %v1191, %v499
      %v1203 = vmul.f32 %v1190, %v503
      %v1204 = vmul.f32 %v1191, %v501
      %v1205 = vmul.f32 %v1191, %v522
      %v1206 = vmul.f32 %v1190, %v526
      %v1207 = vmul.f32 %v1191, %v524
      %v1208 = vmul.f32 %v1190, %v539
      %v1209 = vmul.f32 %v1191, %v543
      %v1210 = vmul.f32 %v1190, %v560
      %v1211 = vmul.f32 %v1191, %v564
      %v1212 = vmul.f32 %v1190, %v562
      %v1213 = vmul.f32 %v1190, %v583
      %v1214 = vmul.f32 %v1191, %v587
      %v1215 = vmul.f32 %v1190, %v585
      %v1216 = vmul.f32 %v1190, %v606
      %v1217 = vmul.f32 %v1191, %v610
      %v1218 = vmul.f32 %v1190, %v608
      %v1219 = vmul.f32 %v1190, %v629
      %v1220 = vmul.f32 %v1191, %v633
      %v1221 = vmul.f32 %v1190, %v631
      %1225 = vrot.lane.b32.xlu0 %v1199, 127
      %v1226 = vpop.permute.xlu0 %1225
      %1227 = vrot.lane.b32.xlu0 %v1200, 127
      %v1228 = vpop.permute.xlu0 %1227
      %1229 = vrot.lane.b32.xlu0 %v1201, 127
      %v1230 = vpop.permute.xlu0 %1229
      %v1231 = vsel %vm525, %v1226, %v1228
      %v1232 = vsel %vm525, %v1228, %v1230
      %1236 = vrot.lane.b32.xlu0 %v1202, 126
      %v1237 = vpop.permute.xlu0 %1236
      %1238 = vrot.lane.b32.xlu0 %v1203, 126
      %v1239 = vpop.permute.xlu0 %1238
      %1240 = vrot.lane.b32.xlu0 %v1204, 126
      %v1241 = vpop.permute.xlu0 %1240
      %v1242 = vsel %vm660, %v1237, %v1239
      %v1243 = vsel %vm660, %v1239, %v1241
      %1247 = vrot.lane.b32.xlu0 %v1205, 112
      %v1248 = vpop.permute.xlu0 %1247
      %1249 = vrot.lane.b32.xlu0 %v1206, 112
      %v1250 = vpop.permute.xlu0 %1249
      %1251 = vrot.lane.b32.xlu0 %v1207, 112
      %v1252 = vpop.permute.xlu0 %1251
      %v1253 = vsel %vm479, %v1248, %v1250
      %v1254 = vsel %vm479, %v1250, %v1252
      %1257 = vrot.lane.b32.xlu0 %v1208, 111
      %v1258 = vpop.permute.xlu0 %1257
      %1259 = vrot.lane.b32.xlu0 %v1209, 111
      %v1260 = vpop.permute.xlu0 %1259
      %v1261 = vsel %vm456, %v1258, %v1260
      %1265 = vrot.lane.b32.xlu0 %v1210, 110
      %v1266 = vpop.permute.xlu0 %1265
      %1267 = vrot.lane.b32.xlu0 %v1211, 110
      %v1268 = vpop.permute.xlu0 %1267
      %1269 = vrot.lane.b32.xlu0 %v1212, 110
      %v1270 = vpop.permute.xlu0 %1269
      %v1271 = vsel %vm690, %v1266, %v1268
      %v1272 = vsel %vm690, %v1268, %v1270
      %1276 = vrot.lane.b32.xlu0 %v1213, 96
      %v1277 = vpop.permute.xlu0 %1276
      %1278 = vrot.lane.b32.xlu0 %v1214, 96
      %v1279 = vpop.permute.xlu0 %1278
      %1280 = vrot.lane.b32.xlu0 %v1215, 96
      %v1281 = vpop.permute.xlu0 %1280
      %v1282 = vsel %vm702, %v1277, %v1279
      %v1283 = vsel %vm702, %v1279, %v1281
      %1287 = vrot.lane.b32.xlu0 %v1216, 95
      %v1288 = vpop.permute.xlu0 %1287
      %1289 = vrot.lane.b32.xlu0 %v1217, 95
      %v1290 = vpop.permute.xlu0 %1289
      %1291 = vrot.lane.b32.xlu0 %v1218, 95
      %v1292 = vpop.permute.xlu0 %1291
      %v1293 = vsel %vm714, %v1288, %v1290
      %v1294 = vsel %vm714, %v1290, %v1292
      %1298 = vrot.lane.b32.xlu0 %v1219, 94
      %v1299 = vpop.permute.xlu0 %1298
      %1300 = vrot.lane.b32.xlu0 %v1220, 94
      %v1301 = vpop.permute.xlu0 %1300
      %1302 = vrot.lane.b32.xlu0 %v1221, 94
      %v1303 = vpop.permute.xlu0 %1302
      %v1304 = vsel %vm726, %v1299, %v1301
      %v1305 = vsel %vm726, %v1301, %v1303
      %1307 = vset.pattern.permute.xlu0 0
      %1308 = vperm.xlu0 %1307, %v1195
      %v1309 = vpop.permute.xlu0 %1308
      %1314 = vrot.lane.b32.xlu0 %v1196, 17
      %v1315 = vpop.permute.xlu0 %1314
      %1316 = vrot.lane.b32.xlu0 %v1197, 17
      %v1317 = vpop.permute.xlu0 %1316
      %1318 = vrot.lane.b32.xlu0 %v1198, 17
      %v1319 = vpop.permute.xlu0 %1318
      %1320 = vrot.lane.b32.xlu0 %v1231, 17
      %v1321 = vpop.permute.xlu0 %1320
      %1322 = vrot.lane.b32.xlu0 %v1232, 17
      %v1323 = vpop.permute.xlu0 %1322
      %1324 = vrot.lane.b32.xlu0 %v1230, 17
      %v1325 = vpop.permute.xlu0 %1324
      %1326 = vrot.lane.b32.xlu0 %v1242, 17
      %v1327 = vpop.permute.xlu0 %1326
      %1328 = vrot.lane.b32.xlu0 %v1243, 17
      %v1329 = vpop.permute.xlu0 %1328
      %1330 = vrot.lane.b32.xlu0 %v1241, 17
      %v1331 = vpop.permute.xlu0 %1330
      %1332 = vrot.lane.b32.xlu0 %v1253, 17
      %v1333 = vpop.permute.xlu0 %1332
      %1334 = vrot.lane.b32.xlu0 %v1254, 17
      %v1335 = vpop.permute.xlu0 %1334
      %1336 = vrot.lane.b32.xlu0 %v1252, 17
      %v1337 = vpop.permute.xlu0 %1336
      %1338 = vrot.lane.b32.xlu0 %v1258, 17
      %v1339 = vpop.permute.xlu0 %1338
      %1340 = vrot.lane.b32.xlu0 %v1261, 17
      %v1341 = vpop.permute.xlu0 %1340
      %1342 = vrot.lane.b32.xlu0 %v1260, 17
      %v1343 = vpop.permute.xlu0 %1342
      %1344 = vrot.lane.b32.xlu0 %v1266, 17
      %v1345 = vpop.permute.xlu0 %1344
      %1346 = vrot.lane.b32.xlu0 %v1271, 17
      %v1347 = vpop.permute.xlu0 %1346
      %1348 = vrot.lane.b32.xlu0 %v1272, 17
      %v1349 = vpop.permute.xlu0 %1348
      %1350 = vrot.lane.b32.xlu0 %v1277, 17
      %v1351 = vpop.permute.xlu0 %1350
      %1352 = vrot.lane.b32.xlu0 %v1282, 17
      %v1353 = vpop.permute.xlu0 %1352
      %1354 = vrot.lane.b32.xlu0 %v1283, 17
      %v1355 = vpop.permute.xlu0 %1354
      %1356 = vrot.lane.b32.xlu0 %v1288, 17
      %v1357 = vpop.permute.xlu0 %1356
      %1358 = vrot.lane.b32.xlu0 %v1293, 17
      %v1359 = vpop.permute.xlu0 %1358
      %1360 = vrot.lane.b32.xlu0 %v1294, 17
      %v1361 = vpop.permute.xlu0 %1360
      %1362 = vrot.lane.b32.xlu0 %v1299, 17
      %v1363 = vpop.permute.xlu0 %1362
      %1364 = vrot.lane.b32.xlu0 %v1304, 17
      %v1365 = vpop.permute.xlu0 %1364
      %1366 = vrot.lane.b32.xlu0 %v1305, 17
      %v1367 = vpop.permute.xlu0 %1366
      %v1368 = vsel %vm632, %v1315, %v1317
      %v1369 = vsel %vm632, %v1317, %v1319
      %v1370 = vsel %vm632, %v1321, %v1323
      %v1371 = vsel %vm632, %v1323, %v1325
      %v1372 = vsel %vm632, %v1327, %v1329
      %v1373 = vsel %vm632, %v1329, %v1331
      %v1374 = vsel %vm632, %v1333, %v1335
      %v1375 = vsel %vm632, %v1335, %v1337
      %v1376 = vsel %vm632, %v1339, %v1341
      %v1377 = vsel %vm632, %v1341, %v1343
      %v1378 = vsel %vm632, %v1345, %v1347
      %v1379 = vsel %vm632, %v1347, %v1349
      %v1380 = vsel %vm632, %v1351, %v1353
      %v1381 = vsel %vm632, %v1353, %v1355
      %v1382 = vsel %vm632, %v1357, %v1359
      %v1383 = vsel %vm632, %v1359, %v1361
      %v1384 = vsel %vm632, %v1363, %v1365
      %v1385 = vsel %vm632, %v1365, %v1367
      %v1405 = vsel %vm827, %v1193, 0
      %1407 = vmatprep.subr.mxu0 %v1369
      %1408 = vmatpush1.msra.mxu0 %v1368
      %1409 = vmatprep.subr.mxu0 %v1371
      %1410 = vmatpush1.msra.mxu0 %v1370
      %1411 = vmatprep.subr.mxu0 %v1373
      %1412 = vmatpush1.msra.mxu0 %v1372
      %1413 = vmatprep.subr.mxu0 %v1375
      %1414 = vmatpush1.msra.mxu0 %v1374
      %1415 = vmatprep.subr.mxu0 %v1377
      %1416 = vmatpush1.msra.mxu0 %v1376
      %1417 = vmatprep.subr.mxu0 %v1379
      %1418 = vmatpush1.msra.mxu0 %v1378
      %1419 = vmatprep.subr.mxu0 %v1381
      %1420 = vmatpush1.msra.mxu0 %v1380
      %1421 = vmatprep.subr.mxu0 %v1383
      %1422 = vmatpush1.msra.mxu0 %v1382
      %1423 = vmatprep.subr.mxu0 %v1385
      %1424 = vmatpush1.msra.mxu0 %v1384
      %1425 = vmatprep.subr.mxu0 0.0
      %1426 = vmatpush1.msra.mxu0 0.0
      %1427 = vmatprep.subr.mxu0 0.0
      %1428 = vmatpush1.msra.mxu0 0.0
      %1429 = vmatprep.subr.mxu0 0.0
      %1430 = vmatpush1.msra.mxu0 0.0
      %1431 = vmatprep.subr.mxu0 0.0
      %1432 = vmatpush1.msra.mxu0 0.0
      %1433 = vmatprep.subr.mxu0 0.0
      %1434 = vmatpush1.msra.mxu0 0.0
      %1435 = vmatprep.subr.mxu0 0.0
      %1436 = vmatpush1.msra.mxu0 0.0
      %1437 = vmatprep.subr.mxu0 0.0
      %1438 = vmatpush1.msra.mxu0 0.0
      %1439 = vmatprep.subr.mxu0 0.0
      %1440 = vmatpush1.msra.mxu0 0.0
      %1441 = vmatprep.subr.mxu0 0.0
      %1442 = vmatpush1.msra.mxu0 0.0
      %1443 = vmatprep.subr.mxu0 0.0
      %1444 = vmatpush1.msra.mxu0 0.0
      %1445 = vmatprep.subr.mxu0 0.0
      %1446 = vmatpush1.msra.mxu0 0.0
      %1447 = vmatprep.subr.mxu0 0.0
      %1448 = vmatpush1.msra.mxu0 0.0
      %1449 = vmatprep.subr.mxu0 0.0
      %1450 = vmatpush1.msra.mxu0 0.0
      %1451 = vmatprep.subr.mxu0 0.0
      %1452 = vmatpush1.msra.mxu0 0.0
      %1453 = vmatprep.subr.mxu0 0.0
      %1454 = vmatpush1.msra.mxu0 0.0
      %1455 = vmatprep.subr.mxu0 0.0
      %1456 = vmatpush1.msra.mxu0 0.0
      %1457 = vmatprep.subr.mxu0 0.0
      %1458 = vmatpush1.msra.mxu0 0.0
      %1459 = vmatprep.subr.mxu0 0.0
      %1460 = vmatpush1.msra.mxu0 0.0
      %1461 = vmatprep.subr.mxu0 0.0
      %1462 = vmatpush1.msra.mxu0 0.0
      %1463 = vmatprep.subr.mxu0 0.0
      %1464 = vmatpush1.msra.mxu0 0.0
      %1465 = vmatprep.subr.mxu0 0.0
      %1466 = vmatpush1.msra.mxu0 0.0
      %1467 = vmatprep.subr.mxu0 0.0
      %1468 = vmatpush1.msra.mxu0 0.0
      %1469 = vmatprep.subr.mxu0 0.0
      %1470 = vmatpush1.msra.mxu0 0.0
      %1471 = vmatprep.mubr.f32.mxu0 0.0
      %1472 = vmatmul.mubr.f32.gmra.mrb[0].mxu0 %v1405
      %v1473 = vpop.f32.mrb[0].mxu0
      %v1474 = vadd.f32 %v1309, %v1473
      %v1475 = vpop.f32.mrb[0].mxu0
      %v1476 = vadd.f32 %v1309, %v1475
      %1477 = vdwg.mxu0
      %v1478 = vmax.f32 %v1474, 0.0
      %v1479 = vmax.f32 %v1476, 0.0
      %v1480 = vld [vmem:[%s7] sm:$0x1]
      %s1481 = sld [smem:[#allocation2]]
      %v1482 = vmul.f32 %v1479, %v453
      %v1483 = vmul.f32 %v1478, %v457
      %v1484 = vmul.f32 %v1479, %v455
      %v1485 = vmul.f32 %v1479, %v476
      %v1486 = vmul.f32 %v1478, %v480
      %v1487 = vmul.f32 %v1479, %v478
      %v1488 = vmul.f32 %v1479, %v499
      %v1489 = vmul.f32 %v1478, %v503
      %v1490 = vmul.f32 %v1479, %v501
      %v1491 = vmul.f32 %v1479, %v522
      %v1492 = vmul.f32 %v1478, %v526
      %v1493 = vmul.f32 %v1479, %v524
      %v1494 = vmul.f32 %v1478, %v539
      %v1495 = vmul.f32 %v1479, %v543
      %v1496 = vmul.f32 %v1478, %v560
      %v1497 = vmul.f32 %v1479, %v564
      %v1498 = vmul.f32 %v1478, %v562
      %v1499 = vmul.f32 %v1478, %v583
      %v1500 = vmul.f32 %v1479, %v587
      %v1501 = vmul.f32 %v1478, %v585
      %v1502 = vmul.f32 %v1478, %v606
      %v1503 = vmul.f32 %v1479, %v610
      %v1504 = vmul.f32 %v1478, %v608
      %v1505 = vmul.f32 %v1478, %v629
      %v1506 = vmul.f32 %v1479, %v633
      %v1507 = vmul.f32 %v1478, %v631
      %1511 = vrot.lane.b32.xlu0 %v1485, 127
      %v1512 = vpop.permute.xlu0 %1511
      %1513 = vrot.lane.b32.xlu0 %v1486, 127
      %v1514 = vpop.permute.xlu0 %1513
      %1515 = vrot.lane.b32.xlu0 %v1487, 127
      %v1516 = vpop.permute.xlu0 %1515
      %v1517 = vsel %vm525, %v1512, %v1514
      %v1518 = vsel %vm525, %v1514, %v1516
      %1522 = vrot.lane.b32.xlu0 %v1488, 126
      %v1523 = vpop.permute.xlu0 %1522
      %1524 = vrot.lane.b32.xlu0 %v1489, 126
      %v1525 = vpop.permute.xlu0 %1524
      %1526 = vrot.lane.b32.xlu0 %v1490, 126
      %v1527 = vpop.permute.xlu0 %1526
      %v1528 = vsel %vm660, %v1523, %v1525
      %v1529 = vsel %vm660, %v1525, %v1527
      %1533 = vrot.lane.b32.xlu0 %v1491, 112
      %v1534 = vpop.permute.xlu0 %1533
      %1535 = vrot.lane.b32.xlu0 %v1492, 112
      %v1536 = vpop.permute.xlu0 %1535
      %1537 = vrot.lane.b32.xlu0 %v1493, 112
      %v1538 = vpop.permute.xlu0 %1537
      %v1539 = vsel %vm479, %v1534, %v1536
      %v1540 = vsel %vm479, %v1536, %v1538
      %1543 = vrot.lane.b32.xlu0 %v1494, 111
      %v1544 = vpop.permute.xlu0 %1543
      %1545 = vrot.lane.b32.xlu0 %v1495, 111
      %v1546 = vpop.permute.xlu0 %1545
      %v1547 = vsel %vm456, %v1544, %v1546
      %1551 = vrot.lane.b32.xlu0 %v1496, 110
      %v1552 = vpop.permute.xlu0 %1551
      %1553 = vrot.lane.b32.xlu0 %v1497, 110
      %v1554 = vpop.permute.xlu0 %1553
      %1555 = vrot.lane.b32.xlu0 %v1498, 110
      %v1556 = vpop.permute.xlu0 %1555
      %v1557 = vsel %vm690, %v1552, %v1554
      %v1558 = vsel %vm690, %v1554, %v1556
      %1562 = vrot.lane.b32.xlu0 %v1499, 96
      %v1563 = vpop.permute.xlu0 %1562
      %1564 = vrot.lane.b32.xlu0 %v1500, 96
      %v1565 = vpop.permute.xlu0 %1564
      %1566 = vrot.lane.b32.xlu0 %v1501, 96
      %v1567 = vpop.permute.xlu0 %1566
      %v1568 = vsel %vm702, %v1563, %v1565
      %v1569 = vsel %vm702, %v1565, %v1567
      %1573 = vrot.lane.b32.xlu0 %v1502, 95
      %v1574 = vpop.permute.xlu0 %1573
      %1575 = vrot.lane.b32.xlu0 %v1503, 95
      %v1576 = vpop.permute.xlu0 %1575
      %1577 = vrot.lane.b32.xlu0 %v1504, 95
      %v1578 = vpop.permute.xlu0 %1577
      %v1579 = vsel %vm714, %v1574, %v1576
      %v1580 = vsel %vm714, %v1576, %v1578
      %1584 = vrot.lane.b32.xlu0 %v1505, 94
      %v1585 = vpop.permute.xlu0 %1584
      %1586 = vrot.lane.b32.xlu0 %v1506, 94
      %v1587 = vpop.permute.xlu0 %1586
      %1588 = vrot.lane.b32.xlu0 %v1507, 94
      %v1589 = vpop.permute.xlu0 %1588
      %v1590 = vsel %vm726, %v1585, %v1587
      %v1591 = vsel %vm726, %v1587, %v1589
      %v1592 = vstv %s1481
      %1596 = vrot.lane.b32.xlu0 %v1482, 17
      %v1597 = vpop.permute.xlu0 %1596
      %1598 = vrot.lane.b32.xlu0 %v1483, 17
      %v1599 = vpop.permute.xlu0 %1598
      %1600 = vrot.lane.b32.xlu0 %v1484, 17
      %v1601 = vpop.permute.xlu0 %1600
      %1602 = vrot.lane.b32.xlu0 %v1517, 17
      %v1603 = vpop.permute.xlu0 %1602
      %1604 = vrot.lane.b32.xlu0 %v1518, 17
      %v1605 = vpop.permute.xlu0 %1604
      %1606 = vrot.lane.b32.xlu0 %v1516, 17
      %v1607 = vpop.permute.xlu0 %1606
      %1608 = vrot.lane.b32.xlu0 %v1528, 17
      %v1609 = vpop.permute.xlu0 %1608
      %1610 = vrot.lane.b32.xlu0 %v1529, 17
      %v1611 = vpop.permute.xlu0 %1610
      %1612 = vrot.lane.b32.xlu0 %v1527, 17
      %v1613 = vpop.permute.xlu0 %1612
      %1614 = vrot.lane.b32.xlu0 %v1539, 17
      %v1615 = vpop.permute.xlu0 %1614
      %1616 = vrot.lane.b32.xlu0 %v1540, 17
      %v1617 = vpop.permute.xlu0 %1616
      %1618 = vrot.lane.b32.xlu0 %v1538, 17
      %v1619 = vpop.permute.xlu0 %1618
      %1620 = vrot.lane.b32.xlu0 %v1544, 17
      %v1621 = vpop.permute.xlu0 %1620
      %1622 = vrot.lane.b32.xlu0 %v1547, 17
      %v1623 = vpop.permute.xlu0 %1622
      %1624 = vrot.lane.b32.xlu0 %v1546, 17
      %v1625 = vpop.permute.xlu0 %1624
      %1626 = vrot.lane.b32.xlu0 %v1552, 17
      %v1627 = vpop.permute.xlu0 %1626
      %1628 = vrot.lane.b32.xlu0 %v1557, 17
      %v1629 = vpop.permute.xlu0 %1628
      %1630 = vrot.lane.b32.xlu0 %v1558, 17
      %v1631 = vpop.permute.xlu0 %1630
      %1632 = vrot.lane.b32.xlu0 %v1563, 17
      %v1633 = vpop.permute.xlu0 %1632
      %1634 = vrot.lane.b32.xlu0 %v1568, 17
      %v1635 = vpop.permute.xlu0 %1634
      %1636 = vrot.lane.b32.xlu0 %v1569, 17
      %v1637 = vpop.permute.xlu0 %1636
      %1638 = vrot.lane.b32.xlu0 %v1574, 17
      %v1639 = vpop.permute.xlu0 %1638
      %1640 = vrot.lane.b32.xlu0 %v1579, 17
      %v1641 = vpop.permute.xlu0 %1640
      %1642 = vrot.lane.b32.xlu0 %v1580, 17
      %v1643 = vpop.permute.xlu0 %1642
      %1644 = vrot.lane.b32.xlu0 %v1585, 17
      %v1645 = vpop.permute.xlu0 %1644
      %1646 = vrot.lane.b32.xlu0 %v1590, 17
      %v1647 = vpop.permute.xlu0 %1646
      %1648 = vrot.lane.b32.xlu0 %v1591, 17
      %v1649 = vpop.permute.xlu0 %1648
      %v1650 = vsel %vm632, %v1597, %v1599
      %v1651 = vsel %vm632, %v1599, %v1601
      %v1652 = vsel %vm632, %v1603, %v1605
      %v1653 = vsel %vm632, %v1605, %v1607
      %v1654 = vsel %vm632, %v1609, %v1611
      %v1655 = vsel %vm632, %v1611, %v1613
      %v1656 = vsel %vm632, %v1615, %v1617
      %v1657 = vsel %vm632, %v1617, %v1619
      %v1658 = vsel %vm632, %v1621, %v1623
      %v1659 = vsel %vm632, %v1623, %v1625
      %v1660 = vsel %vm632, %v1627, %v1629
      %v1661 = vsel %vm632, %v1629, %v1631
      %v1662 = vsel %vm632, %v1633, %v1635
      %v1663 = vsel %vm632, %v1635, %v1637
      %v1664 = vsel %vm632, %v1639, %v1641
      %v1665 = vsel %vm632, %v1641, %v1643
      %v1666 = vsel %vm632, %v1645, %v1647
      %v1667 = vsel %vm632, %v1647, %v1649
      %v1687 = vsel %vm827, %v1480, 0
      %1689 = vmatprep.subr.mxu0 %v1651
      %1690 = vmatpush1.msra.mxu0 %v1650
      %1691 = vmatprep.subr.mxu0 %v1653
      %1692 = vmatpush1.msra.mxu0 %v1652
      %1693 = vmatprep.subr.mxu0 %v1655
      %1694 = vmatpush1.msra.mxu0 %v1654
      %1695 = vmatprep.subr.mxu0 %v1657
      %1696 = vmatpush1.msra.mxu0 %v1656
      %1697 = vmatprep.subr.mxu0 %v1659
      %1698 = vmatpush1.msra.mxu0 %v1658
      %1699 = vmatprep.subr.mxu0 %v1661
      %1700 = vmatpush1.msra.mxu0 %v1660
      %1701 = vmatprep.subr.mxu0 %v1663
      %1702 = vmatpush1.msra.mxu0 %v1662
      %1703 = vmatprep.subr.mxu0 %v1665
      %1704 = vmatpush1.msra.mxu0 %v1664
      %1705 = vmatprep.subr.mxu0 %v1667
      %1706 = vmatpush1.msra.mxu0 %v1666
      %1707 = vmatprep.subr.mxu0 0.0
      %1708 = vmatpush1.msra.mxu0 0.0
      %1709 = vmatprep.subr.mxu0 0.0
      %1710 = vmatpush1.msra.mxu0 0.0
      %1711 = vmatprep.subr.mxu0 0.0
      %1712 = vmatpush1.msra.mxu0 0.0
      %1713 = vmatprep.subr.mxu0 0.0
      %1714 = vmatpush1.msra.mxu0 0.0
      %1715 = vmatprep.subr.mxu0 0.0
      %1716 = vmatpush1.msra.mxu0 0.0
      %1717 = vmatprep.subr.mxu0 0.0
      %1718 = vmatpush1.msra.mxu0 0.0
      %1719 = vmatprep.subr.mxu0 0.0
      %1720 = vmatpush1.msra.mxu0 0.0
      %1721 = vmatprep.subr.mxu0 0.0
      %1722 = vmatpush1.msra.mxu0 0.0
      %1723 = vmatprep.subr.mxu0 0.0
      %1724 = vmatpush1.msra.mxu0 0.0
      %1725 = vmatprep.subr.mxu0 0.0
      %1726 = vmatpush1.msra.mxu0 0.0
      %1727 = vmatprep.subr.mxu0 0.0
      %1728 = vmatpush1.msra.mxu0 0.0
      %1729 = vmatprep.subr.mxu0 0.0
      %1730 = vmatpush1.msra.mxu0 0.0
      %1731 = vmatprep.subr.mxu0 0.0
      %1732 = vmatpush1.msra.mxu0 0.0
      %1733 = vmatprep.subr.mxu0 0.0
      %1734 = vmatpush1.msra.mxu0 0.0
      %1735 = vmatprep.subr.mxu0 0.0
      %1736 = vmatpush1.msra.mxu0 0.0
      %1737 = vmatprep.subr.mxu0 0.0
      %1738 = vmatpush1.msra.mxu0 0.0
      %1739 = vmatprep.subr.mxu0 0.0
      %1740 = vmatpush1.msra.mxu0 0.0
      %1741 = vmatprep.subr.mxu0 0.0
      %1742 = vmatpush1.msra.mxu0 0.0
      %1743 = vmatprep.subr.mxu0 0.0
      %1744 = vmatpush1.msra.mxu0 0.0
      %1745 = vmatprep.subr.mxu0 0.0
      %1746 = vmatpush1.msra.mxu0 0.0
      %1747 = vmatprep.subr.mxu0 0.0
      %1748 = vmatpush1.msra.mxu0 0.0
      %1749 = vmatprep.subr.mxu0 0.0
      %1750 = vmatpush1.msra.mxu0 0.0
      %1751 = vmatprep.subr.mxu0 0.0
      %1752 = vmatpush1.msra.mxu0 0.0
      %1753 = vmatprep.mubr.f32.mxu0 0.0
      %1754 = vmatmul.mubr.f32.gmra.mrb[0].mxu0 %v1687
      %v1755 = vpop.f32.mrb[0].mxu0
      %v1756 = vadd.f32 %v1592, %v1755
      %v1757 = vpop.f32.mrb[0].mxu0
      %v1758 = vadd.f32 %v1592, %v1757
      %1759 = vdwg.mxu0
      %v1762 = vcombine.low %v1756, %v1758
      %v1764 = vunpack.c.l.s4 1966171168
      %v1765 = vunpack.c.0.s8 %v1764
      %v1766 = vlaneseq
      %v1767 = vshrl.u32 %v1766, 7
      %v1768 = vsub.s32 %v1765, %v1767
      %v1769 = vrot.slane %v1762, %v1768
      %v1771 = vunpack.c.l.s4 1966171168
      %v1772 = vunpack.c.0.s8 %v1771
      %v1773 = vlaneseq
      %v1774 = vshrl.u32 %v1773, 7
      %v1775 = vsub.s32 %v1772, %v1774
      %v1776 = vrot.slane %v1769, %v1775
      %v1778 = vadd.f32 %v419, %v1776
      %v1779 = vlaneseq
      %vm1780 = vcmp.ge.s32.totalorder %v1779, 0
      %vm1781 = vcmp.lt.s32.totalorder %v1779, 256
      %vm1782 = vmand %vm1780, %vm1781
      %1783 = vst.msk [vmem:[%s348] sm:$0x3] %vm1782, %v1778
      %p1784 = scmp.lt.s32.totalorder %s21, 1
      %s1785 = scalar_select %p1784, %s21, 1
      %s1786 = smul.addr %s1785, 2
      %s1787 = scalar_lea.vmem %s9, %s1786
      // Predicated region
      $region57: #{ra_forward.1} parent=55 // pred_check
        %p1788 = pneg %p238
      $region58: #{ra_forward.1} parent=55 // pred_check_branch
        %1790 = sbr.rel (%p1788) target = $region60
      $region59: #{ra_forward.1} parent=55 // pred_region
        _
      $region60: #{ra_forward.1} parent=55 // pred_fallthru
        _
    $region56: #{ra_forward.1} parent=5 // pred_fallthru
      _
    %p1791 = scmp.le.s32.totalorder 2, %s16
    // Predicated region
    $region61: #{ra_forward.1} parent=5 // pred_check
      %p1792 = pneg %p1791
    $region62: #{ra_forward.1} parent=5 // pred_check_branch
      %1794 = sbr.rel (%p1792) target = $region64
    $region63: #{ra_forward.1} parent=5 // pred_region
      %s1795 = ssub.s32 %s16, 2
      // Predicated region
      $region65: #{ra_forward.1} parent=63 // pred_check
        %p1796 = pneg %p244
      $region66: #{ra_forward.1} parent=63 // pred_check_branch
        %1798 = sbr.rel (%p1796) target = $region68
      $region67: #{ra_forward.1} parent=63 // pred_region
        %p1799 = scmp.lt.s32.totalorder %s22, 1
        %s1800 = scalar_select %p1799, %s22, 1
        %s1801 = smul.addr %s1800, 2
        %s1802 = scalar_lea.vmem %s9, %s1801
      $region68: #{ra_forward.1} parent=63 // pred_fallthru
        _
    $region64: #{ra_forward.1} parent=5 // pred_fallthru
      _
  $region6: #{ra_forward.1} parent=0 // loop_footer
    %s20 = sadd.s32 1, %s16
  $region7: #{ra_forward.1} parent=0 // loop_footer_branch
    %15 = sbr.rel target = $region3
  $region8: #{ra_forward.1} parent=0 // loop_exit
    _

</llo_original>
